<compile_context>
chip_gen: v7x
topology: tpu7x:2x2x1
jax: 0.10.0
libtpu: 0.0.40
codegen_flags: <defaults>
</compile_context>

<pallas_src>
import functools

import jax
import jax.numpy as jnp
from jax.experimental import pallas as pl
from jax.experimental.pallas import tpu as pltpu

HIGHEST = jax.lax.Precision.HIGHEST  # wrapper-side operator composition + reference


# --------------------------------------------------------------------------
# Fused forward kernel: pure chain of MXU matmuls on one batch tile.
# --------------------------------------------------------------------------
def convnet_kernel(x_ref, w1_ref, w2_ref, ws_ref, bs_ref, out_ref, *, d1, d2, dm):
    f32 = jnp.float32
    # conv1 (circular pad folded into the dense operator W1) + ReLU
    h = jnp.dot(x_ref[...], w1_ref[...], preferred_element_type=f32)
    h = jnp.maximum(h + bs_ref[0:1, :d1], 0.0)                     # (Bt, d1)
    # pool1 + conv2 (folded into W2) + ReLU
    h = jnp.dot(h, w2_ref[...], preferred_element_type=f32)
    h = jnp.maximum(h + bs_ref[1:2, :d2], 0.0)                     # (Bt, d2)
    # pool2 + flatten + fc1 (folded into W3 = ws[0:d2]) + ReLU
    h = jnp.dot(h, ws_ref[0:d2, :], preferred_element_type=f32)
    h = jnp.maximum(h + bs_ref[2:3, :dm], 0.0)                     # (Bt, dm)
    # fc2 + ReLU
    h = jnp.dot(h, ws_ref[d2:d2 + dm, :], preferred_element_type=f32)
    h = jnp.maximum(h + bs_ref[3:4, :dm], 0.0)                     # (Bt, dm)
    # fc3
    out_ref[...] = (jnp.dot(h, ws_ref[d2 + dm:d2 + 2 * dm, :],
                            preferred_element_type=f32)
                    + bs_ref[4:5, :dm])


# --------------------------------------------------------------------------
# Wrapper-side dense operators (weight-only; cacheable per parameter set).
# --------------------------------------------------------------------------
def _round_up(n, m):
    return ((n + m - 1) // m) * m


def _pad2(a, rows, cols):
    return jnp.pad(a, ((0, rows - a.shape[0]), (0, cols - a.shape[1])))


def _pool_matrix(Ho, Wo):
    """(Ho*Wo, (Ho//2)*(Wo//2)) exact 0/0.25 matrix implementing AvgPool2d(2,2)
    on a row-major-flattened spatial axis (floor behaviour for odd dims)."""
    H2, W2 = Ho // 2, Wo // 2
    ii = jnp.arange(2 * H2)
    jj = jnp.arange(2 * W2)
    rows = (ii[:, None] * Wo + jj[None, :]).reshape(-1)
    cols = ((ii[:, None] // 2) * W2 + (jj[None, :] // 2)).reshape(-1)
    P = jnp.zeros((Ho * Wo, H2 * W2), jnp.float32)
    return P.at[rows, cols].set(0.25)


def _conv_operator(w, H, W, paddle):
    """Dense (cin*H*W, cout*Ho*Wo) operator of a circular-padded conv (no bias),
    built exactly by pushing the identity basis through the reference conv."""
    cout, cin, k, _ = w.shape
    n = cin * H * W
    eye = jnp.eye(n, dtype=jnp.float32).reshape(n, cin, H, W)
    eyep = jnp.pad(eye, ((0, 0), (0, 0), (paddle, paddle), (paddle, paddle)),
                   mode="wrap")
    y = jax.lax.conv_general_dilated(
        eyep, w.astype(jnp.float32), (1, 1), "VALID",
        dimension_numbers=("NCHW", "OIHW", "NCHW"), precision=HIGHEST)
    Ho, Wo = H + 2 * paddle - k + 1, W + 2 * paddle - k + 1
    return y.reshape(n, cout * Ho * Wo)


def build_operators(p, *, in_shape, paddle, kernel_size, out_channels):
    """Fold conv1 / pool1+conv2 / pool2+flatten+fc1 / fc2 / fc3 into five dense
    matrices, pad to lane-friendly widths and pack small operands."""
    cin, H, W = in_shape
    k, C = kernel_size, out_channels
    Ho1, Wo1 = H + 2 * paddle - k + 1, W + 2 * paddle - k + 1
    H2, W2 = Ho1 // 2, Wo1 // 2
    Ho2, Wo2 = H2 + 2 * paddle - k + 1, W2 + 2 * paddle - k + 1
    S1, S2 = Ho1 * Wo1, Ho2 * Wo2
    L0, L1 = p["fc1_w"].shape[0], p["fc2_w"].shape[0]
    out_dim = p["fc3_w"].shape[0]

    # Lane-padded stage widths (all multiples of 128; padding is exact zeros).
    d_in = _round_up(cin * H * W, 128)
    d1 = _round_up(C * S1, 128)
    d2 = _round_up(C * S2, 128)
    dm = max(128, _round_up(L0, 128), _round_up(L1, 128), _round_up(out_dim, 128))

    eyeC = jnp.eye(C, dtype=jnp.float32)
    K1 = _conv_operator(p["conv1_w"], H, W, paddle)           # (cin*H*W, C*S1)
    K2 = _conv_operator(p["conv2_w"], H2, W2, paddle)         # (C*H2*W2, C*S2)
    P1 = jnp.kron(eyeC, _pool_matrix(Ho1, Wo1))               # (C*S1, C*H2*W2)
    P2 = jnp.kron(eyeC, _pool_matrix(Ho2, Wo2))               # (C*S2, C*H3*W3)

    W2_op = jnp.dot(P1, K2, precision=HIGHEST)                # pool1 folded into conv2
    W3_op = jnp.dot(P2, p["fc1_w"].T, precision=HIGHEST)      # pool2+flatten into fc1

    w1 = _pad2(K1, d_in, d1)
    w2 = _pad2(W2_op, d1, d2)
    ws = jnp.concatenate([_pad2(W3_op, d2, dm),
                          _pad2(p["fc2_w"].T, dm, dm),
                          _pad2(p["fc3_w"].T, dm, dm)], axis=0)     # (d2+2*dm, dm)

    bw = max(d1, d2, dm)
    bs = jnp.concatenate([
        _pad2(jnp.repeat(p["conv1_b"], S1)[None, :], 1, bw),
        _pad2(jnp.repeat(p["conv2_b"], S2)[None, :], 1, bw),
        _pad2(p["fc1_b"][None, :], 1, bw),
        _pad2(p["fc2_b"][None, :], 1, bw),
        _pad2(p["fc3_b"][None, :], 1, bw),
        jnp.zeros((3, bw), jnp.float32)], axis=0)                    # (8, bw)

    dims = dict(d_in=d_in, d1=d1, d2=d2, dm=dm, out_dim=out_dim,
                in_flat=cin * H * W)
    return dict(w1=w1, w2=w2, ws=ws, bs=bs, dims=dims)


# --------------------------------------------------------------------------
# Forward pass
# --------------------------------------------------------------------------
def convnet_forward(x, p, *, paddle, kernel_size, out_channels, b_tile=None):
    B, cin, H, W = x.shape
    ops = build_operators(p, in_shape=(cin, H, W), paddle=paddle,
                          kernel_size=kernel_size, out_channels=out_channels)
    d = ops["dims"]
    d_in, d1, d2, dm, out_dim = d["d_in"], d["d1"], d["d2"], d["dm"], d["out_dim"]

    if b_tile is None:
        b_tile = min(128, _round_up(B, 8))        # >= 8 batch rows per grid step
    B_pad = _round_up(B, b_tile)

    xf = x.reshape(B, cin * H * W).astype(jnp.float32)
    xf = jnp.pad(xf, ((0, B_pad - B), (0, d_in - cin * H * W)))

    w1, w2, ws, bs = ops["w1"], ops["w2"], ops["ws"], ops["bs"]
    kern = functools.partial(convnet_kernel, d1=d1, d2=d2, dm=dm)

    def full(a):  # whole operand resident in VMEM; same block at every step
        return pl.BlockSpec(a.shape, lambda b: (0,) * a.ndim)

    flops = 2 * B_pad * (d_in * d1 + d1 * d2 + d2 * dm + 2 * dm * dm)
    bytes_accessed = 4 * (xf.size + w1.size + w2.size + ws.size + bs.size
                          + B_pad * dm)

    out = pl.pallas_call(
        kern,
        out_shape=jax.ShapeDtypeStruct((B_pad, dm), jnp.float32),
        grid=(B_pad // b_tile,),
        in_specs=[pl.BlockSpec((b_tile, d_in), lambda b: (b, 0)),
                  full(w1), full(w2), full(ws), full(bs)],
        out_specs=pl.BlockSpec((b_tile, dm), lambda b: (b, 0)),
        compiler_params=pltpu.CompilerParams(
            dimension_semantics=("parallel",)),
        cost_estimate=pl.CostEstimate(flops=int(flops), transcendentals=0,
                                      bytes_accessed=int(bytes_accessed)),
    )(xf, w1, w2, ws, bs)
    return out[:B, :out_dim]


# --------------------------------------------------------------------------
# Parameters + pure-JAX reference (mirrors the PyTorch forward, HIGHEST prec).
# --------------------------------------------------------------------------
def init_params(key, nc, out_channels, kernel_size, linear_dim, fc_in):
    def uniform(k_, shape, fan_in):
        bound = 1.0 / float(fan_in) ** 0.5
        return jax.random.uniform(k_, shape, jnp.float32, -bound, bound)

    ks = jax.random.split(key, 10)
    kk = kernel_size * kernel_size
    p = {}
    p["conv1_w"] = uniform(ks[0], (out_channels, 1, kernel_size, kernel_size), kk)
    p["conv1_b"] = uniform(ks[1], (out_channels,), kk)
    p["conv2_w"] = uniform(ks[2], (out_channels, out_channels, kernel_size,
                                   kernel_size), out_channels * kk)
    p["conv2_b"] = uniform(ks[3], (out_channels,), out_channels * kk)
    p["fc1_w"] = uniform(ks[4], (linear_dim[0], fc_in), fc_in)
    p["fc1_b"] = uniform(ks[5], (linear_dim[0],), fc_in)
    p["fc2_w"] = uniform(ks[6], (linear_dim[1], linear_dim[0]), linear_dim[0])
    p["fc2_b"] = uniform(ks[7], (linear_dim[1],), linear_dim[0])
    p["fc3_w"] = uniform(ks[8], (2 * nc + 1, linear_dim[1]), linear_dim[1])
    p["fc3_b"] = uniform(ks[9], (2 * nc + 1,), linear_dim[1])
    return p


def convnet_reference(x, p, *, paddle, kernel_size):
    pad = ((0, 0), (0, 0), (paddle, paddle), (paddle, paddle))
    dn = ("NCHW", "OIHW", "NCHW")

    def conv(z, w, b):
        zp = jnp.pad(z, pad, mode="wrap")
        y = jax.lax.conv_general_dilated(zp, w, (1, 1), "VALID",
                                         dimension_numbers=dn,
                                         precision=HIGHEST)
        return y + b[None, :, None, None]

    def pool(z):
        B, C, H, W = z.shape
        return z.reshape(B, C, H // 2, 2, W // 2, 2).mean(axis=(3, 5))

    y = pool(jax.nn.relu(conv(x, p["conv1_w"], p["conv1_b"])))
    y = pool(jax.nn.relu(conv(y, p["conv2_w"], p["conv2_b"])))
    f = y.reshape(y.shape[0], -1)
    h = jax.nn.relu(jnp.dot(f, p["fc1_w"].T, precision=HIGHEST) + p["fc1_b"])
    h = jax.nn.relu(jnp.dot(h, p["fc2_w"].T, precision=HIGHEST) + p["fc2_b"])
    return jnp.dot(h, p["fc3_w"].T, precision=HIGHEST) + p["fc3_b"]


if __name__ == "__main__":
    # Small config consistent with the module's __init__ arithmetic.
    data_cfg = {"nc": 4, "n_dir": 16, "n_tgt": 16}
    train_cfg = {"out_channels": 4, "kernel_size": 3, "paddle": 1,
                 "linear_dim": [32, 16], "n_dir_train": 0, "n_tgt_train": 0}

    nc = data_cfg["nc"]
    C = train_cfg["out_channels"]
    k = train_cfg["kernel_size"]
    paddle = train_cfg["paddle"]
    n_dir, n_tgt = data_cfg["n_dir"], data_cfg["n_tgt"]

    od1 = int((n_dir + 2 * paddle - k + 1) / 2)
    od2 = int((n_tgt + 2 * paddle - k + 1) / 2)
    od1 = int((od1 + 2 * paddle - k + 1) / 2)
    od2 = int((od2 + 2 * paddle - k + 1) / 2)
    fc_in = C * od1 * od2  # = 4 * 4 * 4 = 64

    key = jax.random.PRNGKey(0)
    kx, kp = jax.random.split(key)
    x = jax.random.normal(kx, (2, 1, n_dir, n_tgt), jnp.float32)
    params = init_params(kp, nc, C, k, train_cfg["linear_dim"], fc_in)

    out = convnet_forward(x, params, paddle=paddle, kernel_size=k,
                          out_channels=C)
    out = jax.block_until_ready(out)

    ref = convnet_reference(x, params, paddle=paddle, kernel_size=k)
    assert out.shape == (2, 2 * nc + 1), out.shape
    # Kernel matmuls use default MXU precision (bf16 passes, f32 accumulate);
    # the reference runs at HIGHEST, so allow bf16-pass-level rounding noise.
    assert jnp.allclose(out, ref, atol=1e-2, rtol=1e-2), (
        float(jnp.max(jnp.abs(out - ref))))
    print("KERNEL_OK")
</pallas_src>

<mosaic_0001>
module attributes {stable_mosaic.version = 11 : i64} {
  func.func @convnet_kernel(%arg0: i32, %arg1: memref<8x256xf32, #tpu.memory_space<vmem>>, %arg2: memref<256x1024xf32, #tpu.memory_space<vmem>>, %arg3: memref<1024x256xf32, #tpu.memory_space<vmem>>, %arg4: memref<512x128xf32, #tpu.memory_space<vmem>>, %arg5: memref<8x1024xf32, #tpu.memory_space<vmem>>, %arg6: memref<8x128xf32, #tpu.memory_space<vmem>>) attributes {dimension_semantics = [#tpu.dimension_semantics<parallel>], iteration_bounds = array<i64: 1>, scalar_prefetch = 0 : i64, scratch_operands = 0 : i64, tpu.core_type = #tpu.core_type<tc>, window_params = [{transform_indices = @transform_0, window_bounds = array<i64: 8, 256>}, {pipeline_mode = #tpu.pipeline_mode<synchronous>, transform_indices = @transform_1, window_bounds = array<i64: 256, 1024>}, {pipeline_mode = #tpu.pipeline_mode<synchronous>, transform_indices = @transform_2, window_bounds = array<i64: 1024, 256>}, {pipeline_mode = #tpu.pipeline_mode<synchronous>, transform_indices = @transform_3, window_bounds = array<i64: 512, 128>}, {pipeline_mode = #tpu.pipeline_mode<synchronous>, transform_indices = @transform_4, window_bounds = array<i64: 8, 1024>}, {transform_indices = @transform_5, window_bounds = array<i64: 8, 128>}]} {
    %c0 = arith.constant 0 : index
    %c0_0 = arith.constant 0 : index
    %0 = vector.load %arg1[%c0, %c0_0] : memref<8x256xf32, #tpu.memory_space<vmem>>, vector<8x256xf32>
    %c0_1 = arith.constant 0 : index
    %c0_2 = arith.constant 0 : index
    %1 = vector.load %arg2[%c0_1, %c0_2] : memref<256x1024xf32, #tpu.memory_space<vmem>>, vector<256x1024xf32>
    %cst = arith.constant dense<0.000000e+00> : vector<8x1024xf32>
    %2 = tpu.matmul %0, %1, %cst {dimension_numbers = #tpu.dot_dimension_numbers<[1], [0], [0], [1], [0, 0, 1, 1], [], []>} : vector<8x256xf32>, vector<256x1024xf32>, vector<8x1024xf32> -> vector<8x1024xf32>
    %c0_3 = arith.constant 0 : index
    %c0_4 = arith.constant 0 : index
    %3 = vector.load %arg5[%c0_3, %c0_4] : memref<8x1024xf32, #tpu.memory_space<vmem>>, vector<1x1024xf32>
    %4 = vector.broadcast %3 : vector<1x1024xf32> to vector<8x1024xf32>
    %5 = arith.addf %2, %4 : vector<8x1024xf32>
    %cst_5 = arith.constant 0.000000e+00 : f32
    %6 = vector.broadcast %cst_5 : f32 to vector<8x1024xf32>
    %7 = arith.maximumf %5, %6 : vector<8x1024xf32>
    %c0_6 = arith.constant 0 : index
    %c0_7 = arith.constant 0 : index
    %8 = vector.load %arg3[%c0_6, %c0_7] : memref<1024x256xf32, #tpu.memory_space<vmem>>, vector<1024x256xf32>
    %cst_8 = arith.constant dense<0.000000e+00> : vector<8x256xf32>
    %9 = tpu.matmul %7, %8, %cst_8 {dimension_numbers = #tpu.dot_dimension_numbers<[1], [0], [0], [1], [0, 0, 1, 1], [], []>} : vector<8x1024xf32>, vector<1024x256xf32>, vector<8x256xf32> -> vector<8x256xf32>
    %c1 = arith.constant 1 : index
    %c0_9 = arith.constant 0 : index
    %10 = vector.load %arg5[%c1, %c0_9] : memref<8x1024xf32, #tpu.memory_space<vmem>>, vector<1x256xf32>
    %11 = vector.broadcast %10 : vector<1x256xf32> to vector<8x256xf32>
    %12 = arith.addf %9, %11 : vector<8x256xf32>
    %cst_10 = arith.constant 0.000000e+00 : f32
    %13 = vector.broadcast %cst_10 : f32 to vector<8x256xf32>
    %14 = arith.maximumf %12, %13 : vector<8x256xf32>
    %c0_11 = arith.constant 0 : index
    %c0_12 = arith.constant 0 : index
    %15 = vector.load %arg4[%c0_11, %c0_12] : memref<512x128xf32, #tpu.memory_space<vmem>>, vector<256x128xf32>
    %cst_13 = arith.constant dense<0.000000e+00> : vector<8x128xf32>
    %16 = tpu.matmul %14, %15, %cst_13 {dimension_numbers = #tpu.dot_dimension_numbers<[1], [0], [0], [1], [0, 0, 1, 1], [], []>} : vector<8x256xf32>, vector<256x128xf32>, vector<8x128xf32> -> vector<8x128xf32>
    %c2 = arith.constant 2 : index
    %c0_14 = arith.constant 0 : index
    %17 = vector.load %arg5[%c2, %c0_14] : memref<8x1024xf32, #tpu.memory_space<vmem>>, vector<1x128xf32>
    %18 = vector.broadcast %17 : vector<1x128xf32> to vector<8x128xf32>
    %19 = arith.addf %16, %18 : vector<8x128xf32>
    %cst_15 = arith.constant 0.000000e+00 : f32
    %20 = vector.broadcast %cst_15 : f32 to vector<8x128xf32>
    %21 = arith.maximumf %19, %20 : vector<8x128xf32>
    %c256 = arith.constant 256 : index
    %c0_16 = arith.constant 0 : index
    %22 = vector.load %arg4[%c256, %c0_16] : memref<512x128xf32, #tpu.memory_space<vmem>>, vector<128x128xf32>
    %cst_17 = arith.constant dense<0.000000e+00> : vector<8x128xf32>
    %23 = tpu.matmul %21, %22, %cst_17 {dimension_numbers = #tpu.dot_dimension_numbers<[1], [0], [0], [1], [0, 0, 1, 1], [], []>} : vector<8x128xf32>, vector<128x128xf32>, vector<8x128xf32> -> vector<8x128xf32>
    %c3 = arith.constant 3 : index
    %c0_18 = arith.constant 0 : index
    %24 = vector.load %arg5[%c3, %c0_18] : memref<8x1024xf32, #tpu.memory_space<vmem>>, vector<1x128xf32>
    %25 = vector.broadcast %24 : vector<1x128xf32> to vector<8x128xf32>
    %26 = arith.addf %23, %25 : vector<8x128xf32>
    %cst_19 = arith.constant 0.000000e+00 : f32
    %27 = vector.broadcast %cst_19 : f32 to vector<8x128xf32>
    %28 = arith.maximumf %26, %27 : vector<8x128xf32>
    %c384 = arith.constant 384 : index
    %c0_20 = arith.constant 0 : index
    %29 = vector.load %arg4[%c384, %c0_20] : memref<512x128xf32, #tpu.memory_space<vmem>>, vector<128x128xf32>
    %cst_21 = arith.constant dense<0.000000e+00> : vector<8x128xf32>
    %30 = tpu.matmul %28, %29, %cst_21 {dimension_numbers = #tpu.dot_dimension_numbers<[1], [0], [0], [1], [0, 0, 1, 1], [], []>} : vector<8x128xf32>, vector<128x128xf32>, vector<8x128xf32> -> vector<8x128xf32>
    %c4 = arith.constant 4 : index
    %c0_22 = arith.constant 0 : index
    %31 = vector.load %arg5[%c4, %c0_22] : memref<8x1024xf32, #tpu.memory_space<vmem>>, vector<1x128xf32>
    %32 = vector.broadcast %31 : vector<1x128xf32> to vector<8x128xf32>
    %33 = arith.addf %30, %32 : vector<8x128xf32>
    %c0_23 = arith.constant 0 : index
    %c0_24 = arith.constant 0 : index
    %34 = vector.load %arg6[%c0_23, %c0_24] : memref<8x128xf32, #tpu.memory_space<vmem>>, vector<8x128xf32>
    tpu.vector_store %arg6[%c0_23, %c0_24], %33 {strides = array<i32>} : memref<8x128xf32, #tpu.memory_space<vmem>>, vector<8x128xf32>,
    return
  }
  func.func @transform_0(%arg0: i32) -> (i32, i32) {
    %c0_i32 = arith.constant 0 : i32
    %c0_i32_0 = arith.constant 0 : i32
    return %arg0, %c0_i32 : i32, i32
  }
  func.func @transform_1(%arg0: i32) -> (i32, i32) {
    %c0_i32 = arith.constant 0 : i32
    %c0_i32_0 = arith.constant 0 : i32
    %c0_i32_1 = arith.constant 0 : i32
    return %c0_i32, %c0_i32_0 : i32, i32
  }
  func.func @transform_2(%arg0: i32) -> (i32, i32) {
    %c0_i32 = arith.constant 0 : i32
    %c0_i32_0 = arith.constant 0 : i32
    %c0_i32_1 = arith.constant 0 : i32
    return %c0_i32, %c0_i32_0 : i32, i32
  }
  func.func @transform_3(%arg0: i32) -> (i32, i32) {
    %c0_i32 = arith.constant 0 : i32
    %c0_i32_0 = arith.constant 0 : i32
    %c0_i32_1 = arith.constant 0 : i32
    return %c0_i32, %c0_i32_0 : i32, i32
  }
  func.func @transform_4(%arg0: i32) -> (i32, i32) {
    %c0_i32 = arith.constant 0 : i32
    %c0_i32_0 = arith.constant 0 : i32
    %c0_i32_1 = arith.constant 0 : i32
    return %c0_i32, %c0_i32_0 : i32, i32
  }
  func.func @transform_5(%arg0: i32) -> (i32, i32) {
    %c0_i32 = arith.constant 0 : i32
    %c0_i32_0 = arith.constant 0 : i32
    return %arg0, %c0_i32 : i32, i32
  }
}

</mosaic_0001>

<llo_original>
// kernel: tpu_custom_call.1
$region0: #{tpu_custom_call.1}
  #allocation0 [shape = 'u32[]', space=smem, size = 0x4, offset = 0x4, fixed_abs, tag = 'smem constant byte address 0x4 - core index']
  #allocation1 [shape = 'u32[144,128]{1,0:T(1,128)}', space=vmem, size = 0x12000, scoped, tag = 'internal scratch']
  %s0 = inlined_call_operand.hbm [shape: f32[8,256], index: 0, kind: input, shape index: {}]
  %s1 = inlined_call_operand.hbm [shape: f32[256,1024], index: 1, kind: input, shape index: {}]
  %s2 = inlined_call_operand.hbm [shape: f32[1024,256], index: 2, kind: input, shape index: {}]
  %s3 = inlined_call_operand.hbm [shape: f32[512,128], index: 3, kind: input, shape index: {}]
  %s4 = inlined_call_operand.hbm [shape: f32[8,1024], index: 4, kind: input, shape index: {}]
  %s5 = inlined_call_operand.hbm [shape: f32[8,128], index: 5, kind: output, shape index: {}]
  %s6 = sld [smem:[#allocation0]]
  $region50: #{tpu_custom_call.1} parent=0
    _
  %s8 = ssub.s32 1, %s6
  %s9 = scalar_select 0, %s8, %s6
  $region1: #{tpu_custom_call.1} parent=0
    #allocation2 [shape = 'u8[8192]{0}', space=vmem, size = 0x2000, scoped, tag = 'input window, operand 0, single buffered']
    #allocation3 [shape = 's32[1]{0}', space=sflag, size = 0x4, scoped, tag = 'scoped memory for tpu_custom_call.1']
    #allocation4 [shape = 's32[1]{0}', space=sflag, size = 0x4, scoped, tag = 'scoped memory for tpu_custom_call.1']
    #allocation5 [shape = 'u8[1048576]{0}', space=vmem, size = 0x100000, scoped, tag = 'input window, operand 1, single buffered']
    #allocation6 [shape = 's32[1]{0}', space=sflag, size = 0x4, scoped, tag = 'scoped memory for tpu_custom_call.1']
    #allocation7 [shape = 'u8[1048576]{0}', space=vmem, size = 0x100000, scoped, tag = 'input window, operand 2, single buffered']
    #allocation8 [shape = 'u8[262144]{0}', space=vmem, size = 0x40000, scoped, tag = 'input window, operand 3, single buffered']
    #allocation9 [shape = 's32[1]{0}', space=sflag, size = 0x4, scoped, tag = 'scoped memory for tpu_custom_call.1']
    #allocation10 [shape = 'u8[32768]{0}', space=vmem, size = 0x8000, scoped, tag = 'input window, operand 4, single buffered']
    #allocation11 [shape = 'u8[4096]{0}', space=vmem, size = 0x1000, scoped, tag = 'output window, operand 0, single buffered']
    %10 = vsyncpa [#allocation3], 0
    %11 = vsyncpa [#allocation6], 0
    %12 = vsyncpa [#allocation9], 0
    %13 = vsyncpa [#allocation4], 0
    // Predicated region
    $region2: #{tpu_custom_call.1} parent=1 // pred_check
      _
    $region3: #{tpu_custom_call.1} parent=1 // pred_check_branch
      %15 = sbr.rel (0) target = $region5
    $region4: #{tpu_custom_call.1} parent=1 // pred_region
      %s17 = ssub.s32 256, 256
      %18 = vsyncadd [#allocation3], %s17
      %s20 = sshll.u32 [#allocation2], 4
      %s21 = int_to_ptr.vmem [resolvable:$true] %s20
      %23 = dma.hbm_to_vmem [thread:$0]  %s0, 256, %s21, [#allocation3]
    $region5: #{tpu_custom_call.1} parent=1 // pred_fallthru
      _
    // Predicated region
    $region6: #{tpu_custom_call.1} parent=1 // pred_check
      _
    $region7: #{tpu_custom_call.1} parent=1 // pred_check_branch
      %25 = sbr.rel (0) target = $region9
    $region8: #{tpu_custom_call.1} parent=1 // pred_region
      %s27 = ssub.s32 32768, 32768
      %28 = vsyncadd [#allocation6], %s27
      %s29 = sshll.u32 [#allocation5], 4
      %s30 = int_to_ptr.vmem [resolvable:$true] %s29
      %35 = dma.hbm_to_vmem [thread:$0]  %s1, 32768, %s30, [#allocation6], 1024, 1024, 64
    $region9: #{tpu_custom_call.1} parent=1 // pred_fallthru
      _
    // Predicated region
    $region10: #{tpu_custom_call.1} parent=1 // pred_check
      _
    $region11: #{tpu_custom_call.1} parent=1 // pred_check_branch
      %37 = sbr.rel (0) target = $region13
    $region12: #{tpu_custom_call.1} parent=1 // pred_region
      %s39 = ssub.s32 32768, 32768
      %40 = vsyncadd [#allocation6], %s39
      %s41 = sshll.u32 [#allocation7], 4
      %s42 = int_to_ptr.vmem [resolvable:$true] %s41
      %47 = dma.hbm_to_vmem [thread:$0]  %s2, 32768, %s42, [#allocation6], 256, 256, 16
    $region13: #{tpu_custom_call.1} parent=1 // pred_fallthru
      _
    // Predicated region
    $region14: #{tpu_custom_call.1} parent=1 // pred_check
      _
    $region15: #{tpu_custom_call.1} parent=1 // pred_check_branch
      %49 = sbr.rel (0) target = $region17
    $region16: #{tpu_custom_call.1} parent=1 // pred_region
      %s51 = ssub.s32 8192, 8192
      %52 = vsyncadd [#allocation9], %s51
      %s53 = sshll.u32 [#allocation8], 4
      %s54 = int_to_ptr.vmem [resolvable:$true] %s53
      %59 = dma.hbm_to_vmem [thread:$0]  %s3, 8192, %s54, [#allocation9], 128, 128, 8
    $region17: #{tpu_custom_call.1} parent=1 // pred_fallthru
      _
    // Predicated region
    $region18: #{tpu_custom_call.1} parent=1 // pred_check
      _
    $region19: #{tpu_custom_call.1} parent=1 // pred_check_branch
      %61 = sbr.rel (0) target = $region21
    $region20: #{tpu_custom_call.1} parent=1 // pred_region
      %s63 = ssub.s32 1024, 1024
      %64 = vsyncadd [#allocation9], %s63
      %s66 = sshll.u32 [#allocation10], 4
      %s67 = int_to_ptr.vmem [resolvable:$true] %s66
      %69 = dma.hbm_to_vmem [thread:$0]  %s4, 1024, %s67, [#allocation9]
    $region21: #{tpu_custom_call.1} parent=1 // pred_fallthru
      _
    // Predicated region
    $region22: #{tpu_custom_call.1} parent=1 // pred_check
      _
    $region23: #{tpu_custom_call.1} parent=1 // pred_check_branch
      %71 = sbr.rel (0) target = $region25
    $region24: #{tpu_custom_call.1} parent=1 // pred_region
      %72 = dma.done [#allocation3], 256
    $region25: #{tpu_custom_call.1} parent=1 // pred_fallthru
      _
    // Predicated region
    $region26: #{tpu_custom_call.1} parent=1 // pred_check
      _
    $region27: #{tpu_custom_call.1} parent=1 // pred_check_branch
      %74 = sbr.rel (0) target = $region29
    $region28: #{tpu_custom_call.1} parent=1 // pred_region
      %75 = dma.done [#allocation6], 32768
    $region29: #{tpu_custom_call.1} parent=1 // pred_fallthru
      _
    // Predicated region
    $region30: #{tpu_custom_call.1} parent=1 // pred_check
      _
    $region31: #{tpu_custom_call.1} parent=1 // pred_check_branch
      %77 = sbr.rel (0) target = $region33
    $region32: #{tpu_custom_call.1} parent=1 // pred_region
      %78 = dma.done [#allocation6], 32768
    $region33: #{tpu_custom_call.1} parent=1 // pred_fallthru
      _
    // Predicated region
    $region34: #{tpu_custom_call.1} parent=1 // pred_check
      _
    $region35: #{tpu_custom_call.1} parent=1 // pred_check_branch
      %80 = sbr.rel (0) target = $region37
    $region36: #{tpu_custom_call.1} parent=1 // pred_region
      %81 = dma.done [#allocation9], 8192
    $region37: #{tpu_custom_call.1} parent=1 // pred_fallthru
      _
    // Predicated region
    $region38: #{tpu_custom_call.1} parent=1 // pred_check
      _
    $region39: #{tpu_custom_call.1} parent=1 // pred_check_branch
      %83 = sbr.rel (0) target = $region41
    $region40: #{tpu_custom_call.1} parent=1 // pred_region
      %84 = dma.done [#allocation9], 1024
    $region41: #{tpu_custom_call.1} parent=1 // pred_fallthru
      _
    %v85 = vld [vmem:[#allocation2] sm:$0xff]
    %v86 = vld [vmem:[#allocation2 + $0x8] sm:$0xff]
    %v87 = vld [vmem:[#allocation5] sm:$0xff]
    %v88 = vld [vmem:[#allocation5 + $0x8] sm:$0xff]
    %v89 = vld [vmem:[#allocation5 + $0x10] sm:$0xff]
    %v90 = vld [vmem:[#allocation5 + $0x18] sm:$0xff]
    %v91 = vld [vmem:[#allocation5 + $0x20] sm:$0xff]
    %v92 = vld [vmem:[#allocation5 + $0x28] sm:$0xff]
    %v93 = vld [vmem:[#allocation5 + $0x30] sm:$0xff]
    %v94 = vld [vmem:[#allocation5 + $0x38] sm:$0xff]
    %v95 = vld [vmem:[#allocation5 + $0x40] sm:$0xff]
    %v96 = vld [vmem:[#allocation5 + $0x48] sm:$0xff]
    %v97 = vld [vmem:[#allocation5 + $0x50] sm:$0xff]
    %v98 = vld [vmem:[#allocation5 + $0x58] sm:$0xff]
    %v99 = vld [vmem:[#allocation5 + $0x60] sm:$0xff]
    %v100 = vld [vmem:[#allocation5 + $0x68] sm:$0xff]
    %v101 = vld [vmem:[#allocation5 + $0x70] sm:$0xff]
    %v102 = vld [vmem:[#allocation5 + $0x78] sm:$0xff]
    %v103 = vld [vmem:[#allocation5 + $0x80] sm:$0xff]
    %v104 = vld [vmem:[#allocation5 + $0x88] sm:$0xff]
    %v105 = vld [vmem:[#allocation5 + $0x90] sm:$0xff]
    %v106 = vld [vmem:[#allocation5 + $0x98] sm:$0xff]
    %v107 = vld [vmem:[#allocation5 + $0xa0] sm:$0xff]
    %v108 = vld [vmem:[#allocation5 + $0xa8] sm:$0xff]
    %v109 = vld [vmem:[#allocation5 + $0xb0] sm:$0xff]
    %v110 = vld [vmem:[#allocation5 + $0xb8] sm:$0xff]
    %v111 = vld [vmem:[#allocation5 + $0xc0] sm:$0xff]
    %v112 = vld [vmem:[#allocation5 + $0xc8] sm:$0xff]
    %v113 = vld [vmem:[#allocation5 + $0xd0] sm:$0xff]
    %v114 = vld [vmem:[#allocation5 + $0xd8] sm:$0xff]
    %v115 = vld [vmem:[#allocation5 + $0xe0] sm:$0xff]
    %v116 = vld [vmem:[#allocation5 + $0xe8] sm:$0xff]
    %v117 = vld [vmem:[#allocation5 + $0xf0] sm:$0xff]
    %v118 = vld [vmem:[#allocation5 + $0xf8] sm:$0xff]
    %v119 = vld [vmem:[#allocation5 + $0x100] sm:$0xff]
    %v120 = vld [vmem:[#allocation5 + $0x108] sm:$0xff]
    %v121 = vld [vmem:[#allocation5 + $0x110] sm:$0xff]
    %v122 = vld [vmem:[#allocation5 + $0x118] sm:$0xff]
    %v123 = vld [vmem:[#allocation5 + $0x120] sm:$0xff]
    %v124 = vld [vmem:[#allocation5 + $0x128] sm:$0xff]
    %v125 = vld [vmem:[#allocation5 + $0x130] sm:$0xff]
    %v126 = vld [vmem:[#allocation5 + $0x138] sm:$0xff]
    %v127 = vld [vmem:[#allocation5 + $0x140] sm:$0xff]
    %v128 = vld [vmem:[#allocation5 + $0x148] sm:$0xff]
    %v129 = vld [vmem:[#allocation5 + $0x150] sm:$0xff]
    %v130 = vld [vmem:[#allocation5 + $0x158] sm:$0xff]
    %v131 = vld [vmem:[#allocation5 + $0x160] sm:$0xff]
    %v132 = vld [vmem:[#allocation5 + $0x168] sm:$0xff]
    %v133 = vld [vmem:[#allocation5 + $0x170] sm:$0xff]
    %v134 = vld [vmem:[#allocation5 + $0x178] sm:$0xff]
    %v135 = vld [vmem:[#allocation5 + $0x180] sm:$0xff]
    %v136 = vld [vmem:[#allocation5 + $0x188] sm:$0xff]
    %v137 = vld [vmem:[#allocation5 + $0x190] sm:$0xff]
    %v138 = vld [vmem:[#allocation5 + $0x198] sm:$0xff]
    %v139 = vld [vmem:[#allocation5 + $0x1a0] sm:$0xff]
    %v140 = vld [vmem:[#allocation5 + $0x1a8] sm:$0xff]
    %v141 = vld [vmem:[#allocation5 + $0x1b0] sm:$0xff]
    %v142 = vld [vmem:[#allocation5 + $0x1b8] sm:$0xff]
    %v143 = vld [vmem:[#allocation5 + $0x1c0] sm:$0xff]
    %v144 = vld [vmem:[#allocation5 + $0x1c8] sm:$0xff]
    %v145 = vld [vmem:[#allocation5 + $0x1d0] sm:$0xff]
    %v146 = vld [vmem:[#allocation5 + $0x1d8] sm:$0xff]
    %v147 = vld [vmem:[#allocation5 + $0x1e0] sm:$0xff]
    %v148 = vld [vmem:[#allocation5 + $0x1e8] sm:$0xff]
    %v149 = vld [vmem:[#allocation5 + $0x1f0] sm:$0xff]
    %v150 = vld [vmem:[#allocation5 + $0x1f8] sm:$0xff]
    %v151 = vld [vmem:[#allocation5 + $0x200] sm:$0xff]
    %v152 = vld [vmem:[#allocation5 + $0x208] sm:$0xff]
    %v153 = vld [vmem:[#allocation5 + $0x210] sm:$0xff]
    %v154 = vld [vmem:[#allocation5 + $0x218] sm:$0xff]
    %v155 = vld [vmem:[#allocation5 + $0x220] sm:$0xff]
    %v156 = vld [vmem:[#allocation5 + $0x228] sm:$0xff]
    %v157 = vld [vmem:[#allocation5 + $0x230] sm:$0xff]
    %v158 = vld [vmem:[#allocation5 + $0x238] sm:$0xff]
    %v159 = vld [vmem:[#allocation5 + $0x240] sm:$0xff]
    %v160 = vld [vmem:[#allocation5 + $0x248] sm:$0xff]
    %v161 = vld [vmem:[#allocation5 + $0x250] sm:$0xff]
    %v162 = vld [vmem:[#allocation5 + $0x258] sm:$0xff]
    %v163 = vld [vmem:[#allocation5 + $0x260] sm:$0xff]
    %v164 = vld [vmem:[#allocation5 + $0x268] sm:$0xff]
    %v165 = vld [vmem:[#allocation5 + $0x270] sm:$0xff]
    %v166 = vld [vmem:[#allocation5 + $0x278] sm:$0xff]
    %v167 = vld [vmem:[#allocation5 + $0x280] sm:$0xff]
    %v168 = vld [vmem:[#allocation5 + $0x288] sm:$0xff]
    %v169 = vld [vmem:[#allocation5 + $0x290] sm:$0xff]
    %v170 = vld [vmem:[#allocation5 + $0x298] sm:$0xff]
    %v171 = vld [vmem:[#allocation5 + $0x2a0] sm:$0xff]
    %v172 = vld [vmem:[#allocation5 + $0x2a8] sm:$0xff]
    %v173 = vld [vmem:[#allocation5 + $0x2b0] sm:$0xff]
    %v174 = vld [vmem:[#allocation5 + $0x2b8] sm:$0xff]
    %v175 = vld [vmem:[#allocation5 + $0x2c0] sm:$0xff]
    %v176 = vld [vmem:[#allocation5 + $0x2c8] sm:$0xff]
    %v177 = vld [vmem:[#allocation5 + $0x2d0] sm:$0xff]
    %v178 = vld [vmem:[#allocation5 + $0x2d8] sm:$0xff]
    %v179 = vld [vmem:[#allocation5 + $0x2e0] sm:$0xff]
    %v180 = vld [vmem:[#allocation5 + $0x2e8] sm:$0xff]
    %v181 = vld [vmem:[#allocation5 + $0x2f0] sm:$0xff]
    %v182 = vld [vmem:[#allocation5 + $0x2f8] sm:$0xff]
    %v183 = vld [vmem:[#allocation5 + $0x300] sm:$0xff]
    %v184 = vld [vmem:[#allocation5 + $0x308] sm:$0xff]
    %v185 = vld [vmem:[#allocation5 + $0x310] sm:$0xff]
    %v186 = vld [vmem:[#allocation5 + $0x318] sm:$0xff]
    %v187 = vld [vmem:[#allocation5 + $0x320] sm:$0xff]
    %v188 = vld [vmem:[#allocation5 + $0x328] sm:$0xff]
    %v189 = vld [vmem:[#allocation5 + $0x330] sm:$0xff]
    %v190 = vld [vmem:[#allocation5 + $0x338] sm:$0xff]
    %v191 = vld [vmem:[#allocation5 + $0x340] sm:$0xff]
    %v192 = vld [vmem:[#allocation5 + $0x348] sm:$0xff]
    %v193 = vld [vmem:[#allocation5 + $0x350] sm:$0xff]
    %v194 = vld [vmem:[#allocation5 + $0x358] sm:$0xff]
    %v195 = vld [vmem:[#allocation5 + $0x360] sm:$0xff]
    %v196 = vld [vmem:[#allocation5 + $0x368] sm:$0xff]
    %v197 = vld [vmem:[#allocation5 + $0x370] sm:$0xff]
    %v198 = vld [vmem:[#allocation5 + $0x378] sm:$0xff]
    %v199 = vld [vmem:[#allocation5 + $0x380] sm:$0xff]
    %v200 = vld [vmem:[#allocation5 + $0x388] sm:$0xff]
    %v201 = vld [vmem:[#allocation5 + $0x390] sm:$0xff]
    %v202 = vld [vmem:[#allocation5 + $0x398] sm:$0xff]
    %v203 = vld [vmem:[#allocation5 + $0x3a0] sm:$0xff]
    %v204 = vld [vmem:[#allocation5 + $0x3a8] sm:$0xff]
    %v205 = vld [vmem:[#allocation5 + $0x3b0] sm:$0xff]
    %v206 = vld [vmem:[#allocation5 + $0x3b8] sm:$0xff]
    %v207 = vld [vmem:[#allocation5 + $0x3c0] sm:$0xff]
    %v208 = vld [vmem:[#allocation5 + $0x3c8] sm:$0xff]
    %v209 = vld [vmem:[#allocation5 + $0x3d0] sm:$0xff]
    %v210 = vld [vmem:[#allocation5 + $0x3d8] sm:$0xff]
    %v211 = vld [vmem:[#allocation5 + $0x3e0] sm:$0xff]
    %v212 = vld [vmem:[#allocation5 + $0x3e8] sm:$0xff]
    %v213 = vld [vmem:[#allocation5 + $0x3f0] sm:$0xff]
    %v214 = vld [vmem:[#allocation5 + $0x3f8] sm:$0xff]
    %v215 = vld [vmem:[#allocation5 + $0x400] sm:$0xff]
    %v216 = vld [vmem:[#allocation5 + $0x408] sm:$0xff]
    %v217 = vld [vmem:[#allocation5 + $0x410] sm:$0xff]
    %v218 = vld [vmem:[#allocation5 + $0x418] sm:$0xff]
    %v219 = vld [vmem:[#allocation5 + $0x420] sm:$0xff]
    %v220 = vld [vmem:[#allocation5 + $0x428] sm:$0xff]
    %v221 = vld [vmem:[#allocation5 + $0x430] sm:$0xff]
    %v222 = vld [vmem:[#allocation5 + $0x438] sm:$0xff]
    %v223 = vld [vmem:[#allocation5 + $0x440] sm:$0xff]
    %v224 = vld [vmem:[#allocation5 + $0x448] sm:$0xff]
    %v225 = vld [vmem:[#allocation5 + $0x450] sm:$0xff]
    %v226 = vld [vmem:[#allocation5 + $0x458] sm:$0xff]
    %v227 = vld [vmem:[#allocation5 + $0x460] sm:$0xff]
    %v228 = vld [vmem:[#allocation5 + $0x468] sm:$0xff]
    %v229 = vld [vmem:[#allocation5 + $0x470] sm:$0xff]
    %v230 = vld [vmem:[#allocation5 + $0x478] sm:$0xff]
    %v231 = vld [vmem:[#allocation5 + $0x480] sm:$0xff]
    %v232 = vld [vmem:[#allocation5 + $0x488] sm:$0xff]
    %v233 = vld [vmem:[#allocation5 + $0x490] sm:$0xff]
    %v234 = vld [vmem:[#allocation5 + $0x498] sm:$0xff]
    %v235 = vld [vmem:[#allocation5 + $0x4a0] sm:$0xff]
    %v236 = vld [vmem:[#allocation5 + $0x4a8] sm:$0xff]
    %v237 = vld [vmem:[#allocation5 + $0x4b0] sm:$0xff]
    %v238 = vld [vmem:[#allocation5 + $0x4b8] sm:$0xff]
    %v239 = vld [vmem:[#allocation5 + $0x4c0] sm:$0xff]
    %v240 = vld [vmem:[#allocation5 + $0x4c8] sm:$0xff]
    %v241 = vld [vmem:[#allocation5 + $0x4d0] sm:$0xff]
    %v242 = vld [vmem:[#allocation5 + $0x4d8] sm:$0xff]
    %v243 = vld [vmem:[#allocation5 + $0x4e0] sm:$0xff]
    %v244 = vld [vmem:[#allocation5 + $0x4e8] sm:$0xff]
    %v245 = vld [vmem:[#allocation5 + $0x4f0] sm:$0xff]
    %v246 = vld [vmem:[#allocation5 + $0x4f8] sm:$0xff]
    %v247 = vld [vmem:[#allocation5 + $0x500] sm:$0xff]
    %v248 = vld [vmem:[#allocation5 + $0x508] sm:$0xff]
    %v249 = vld [vmem:[#allocation5 + $0x510] sm:$0xff]
    %v250 = vld [vmem:[#allocation5 + $0x518] sm:$0xff]
    %v251 = vld [vmem:[#allocation5 + $0x520] sm:$0xff]
    %v252 = vld [vmem:[#allocation5 + $0x528] sm:$0xff]
    %v253 = vld [vmem:[#allocation5 + $0x530] sm:$0xff]
    %v254 = vld [vmem:[#allocation5 + $0x538] sm:$0xff]
    %v255 = vld [vmem:[#allocation5 + $0x540] sm:$0xff]
    %v256 = vld [vmem:[#allocation5 + $0x548] sm:$0xff]
    %v257 = vld [vmem:[#allocation5 + $0x550] sm:$0xff]
    %v258 = vld [vmem:[#allocation5 + $0x558] sm:$0xff]
    %v259 = vld [vmem:[#allocation5 + $0x560] sm:$0xff]
    %v260 = vld [vmem:[#allocation5 + $0x568] sm:$0xff]
    %v261 = vld [vmem:[#allocation5 + $0x570] sm:$0xff]
    %v262 = vld [vmem:[#allocation5 + $0x578] sm:$0xff]
    %v263 = vld [vmem:[#allocation5 + $0x580] sm:$0xff]
    %v264 = vld [vmem:[#allocation5 + $0x588] sm:$0xff]
    %v265 = vld [vmem:[#allocation5 + $0x590] sm:$0xff]
    %v266 = vld [vmem:[#allocation5 + $0x598] sm:$0xff]
    %v267 = vld [vmem:[#allocation5 + $0x5a0] sm:$0xff]
    %v268 = vld [vmem:[#allocation5 + $0x5a8] sm:$0xff]
    %v269 = vld [vmem:[#allocation5 + $0x5b0] sm:$0xff]
    %v270 = vld [vmem:[#allocation5 + $0x5b8] sm:$0xff]
    %v271 = vld [vmem:[#allocation5 + $0x5c0] sm:$0xff]
    %v272 = vld [vmem:[#allocation5 + $0x5c8] sm:$0xff]
    %v273 = vld [vmem:[#allocation5 + $0x5d0] sm:$0xff]
    %v274 = vld [vmem:[#allocation5 + $0x5d8] sm:$0xff]
    %v275 = vld [vmem:[#allocation5 + $0x5e0] sm:$0xff]
    %v276 = vld [vmem:[#allocation5 + $0x5e8] sm:$0xff]
    %v277 = vld [vmem:[#allocation5 + $0x5f0] sm:$0xff]
    %v278 = vld [vmem:[#allocation5 + $0x5f8] sm:$0xff]
    %v279 = vld [vmem:[#allocation5 + $0x600] sm:$0xff]
    %v280 = vld [vmem:[#allocation5 + $0x608] sm:$0xff]
    %v281 = vld [vmem:[#allocation5 + $0x610] sm:$0xff]
    %v282 = vld [vmem:[#allocation5 + $0x618] sm:$0xff]
    %v283 = vld [vmem:[#allocation5 + $0x620] sm:$0xff]
    %v284 = vld [vmem:[#allocation5 + $0x628] sm:$0xff]
    %v285 = vld [vmem:[#allocation5 + $0x630] sm:$0xff]
    %v286 = vld [vmem:[#allocation5 + $0x638] sm:$0xff]
    %v287 = vld [vmem:[#allocation5 + $0x640] sm:$0xff]
    %v288 = vld [vmem:[#allocation5 + $0x648] sm:$0xff]
    %v289 = vld [vmem:[#allocation5 + $0x650] sm:$0xff]
    %v290 = vld [vmem:[#allocation5 + $0x658] sm:$0xff]
    %v291 = vld [vmem:[#allocation5 + $0x660] sm:$0xff]
    %v292 = vld [vmem:[#allocation5 + $0x668] sm:$0xff]
    %v293 = vld [vmem:[#allocation5 + $0x670] sm:$0xff]
    %v294 = vld [vmem:[#allocation5 + $0x678] sm:$0xff]
    %v295 = vld [vmem:[#allocation5 + $0x680] sm:$0xff]
    %v296 = vld [vmem:[#allocation5 + $0x688] sm:$0xff]
    %v297 = vld [vmem:[#allocation5 + $0x690] sm:$0xff]
    %v298 = vld [vmem:[#allocation5 + $0x698] sm:$0xff]
    %v299 = vld [vmem:[#allocation5 + $0x6a0] sm:$0xff]
    %v300 = vld [vmem:[#allocation5 + $0x6a8] sm:$0xff]
    %v301 = vld [vmem:[#allocation5 + $0x6b0] sm:$0xff]
    %v302 = vld [vmem:[#allocation5 + $0x6b8] sm:$0xff]
    %v303 = vld [vmem:[#allocation5 + $0x6c0] sm:$0xff]
    %v304 = vld [vmem:[#allocation5 + $0x6c8] sm:$0xff]
    %v305 = vld [vmem:[#allocation5 + $0x6d0] sm:$0xff]
    %v306 = vld [vmem:[#allocation5 + $0x6d8] sm:$0xff]
    %v307 = vld [vmem:[#allocation5 + $0x6e0] sm:$0xff]
    %v308 = vld [vmem:[#allocation5 + $0x6e8] sm:$0xff]
    %v309 = vld [vmem:[#allocation5 + $0x6f0] sm:$0xff]
    %v310 = vld [vmem:[#allocation5 + $0x6f8] sm:$0xff]
    %v311 = vld [vmem:[#allocation5 + $0x700] sm:$0xff]
    %v312 = vld [vmem:[#allocation5 + $0x708] sm:$0xff]
    %v313 = vld [vmem:[#allocation5 + $0x710] sm:$0xff]
    %v314 = vld [vmem:[#allocation5 + $0x718] sm:$0xff]
    %v315 = vld [vmem:[#allocation5 + $0x720] sm:$0xff]
    %v316 = vld [vmem:[#allocation5 + $0x728] sm:$0xff]
    %v317 = vld [vmem:[#allocation5 + $0x730] sm:$0xff]
    %v318 = vld [vmem:[#allocation5 + $0x738] sm:$0xff]
    %v319 = vld [vmem:[#allocation5 + $0x740] sm:$0xff]
    %v320 = vld [vmem:[#allocation5 + $0x748] sm:$0xff]
    %v321 = vld [vmem:[#allocation5 + $0x750] sm:$0xff]
    %v322 = vld [vmem:[#allocation5 + $0x758] sm:$0xff]
    %v323 = vld [vmem:[#allocation5 + $0x760] sm:$0xff]
    %v324 = vld [vmem:[#allocation5 + $0x768] sm:$0xff]
    %v325 = vld [vmem:[#allocation5 + $0x770] sm:$0xff]
    %v326 = vld [vmem:[#allocation5 + $0x778] sm:$0xff]
    %v327 = vld [vmem:[#allocation5 + $0x780] sm:$0xff]
    %v328 = vld [vmem:[#allocation5 + $0x788] sm:$0xff]
    %v329 = vld [vmem:[#allocation5 + $0x790] sm:$0xff]
    %v330 = vld [vmem:[#allocation5 + $0x798] sm:$0xff]
    %v331 = vld [vmem:[#allocation5 + $0x7a0] sm:$0xff]
    %v332 = vld [vmem:[#allocation5 + $0x7a8] sm:$0xff]
    %v333 = vld [vmem:[#allocation5 + $0x7b0] sm:$0xff]
    %v334 = vld [vmem:[#allocation5 + $0x7b8] sm:$0xff]
    %v335 = vld [vmem:[#allocation5 + $0x7c0] sm:$0xff]
    %v336 = vld [vmem:[#allocation5 + $0x7c8] sm:$0xff]
    %v337 = vld [vmem:[#allocation5 + $0x7d0] sm:$0xff]
    %v338 = vld [vmem:[#allocation5 + $0x7d8] sm:$0xff]
    %v339 = vld [vmem:[#allocation5 + $0x7e0] sm:$0xff]
    %v340 = vld [vmem:[#allocation5 + $0x7e8] sm:$0xff]
    %v341 = vld [vmem:[#allocation5 + $0x7f0] sm:$0xff]
    %v342 = vld [vmem:[#allocation5 + $0x7f8] sm:$0xff]
    %v343 = vld [vmem:[#allocation10] ss:$8 sm:$0xf]
    %v344 = vld [vmem:[#allocation10] ss:$8 sm:$0xf0]
    %v345 = vor.u32 %v343, %v344
    %v347 = vlaneseq
    %v348 = vshrl.u32 %v347, 7
    %v349 = vsub.s32 0, %v348
    %v350 = vrot.slane %v345, %v349
    %v351 = vlaneseq
    %v352 = vshrl.u32 %v351, 7
    %v353 = vsub.s32 1, %v352
    %v354 = vrot.slane %v345, %v353
    %v355 = vlaneseq
    %v356 = vshrl.u32 %v355, 7
    %v357 = vsub.s32 2, %v356
    %v358 = vrot.slane %v345, %v357
    %v359 = vlaneseq
    %v360 = vshrl.u32 %v359, 7
    %v361 = vsub.s32 3, %v360
    %v362 = vrot.slane %v345, %v361
    %v363 = vlaneseq
    %v364 = vshrl.u32 %v363, 7
    %v365 = vsub.s32 4, %v364
    %v366 = vrot.slane %v345, %v365
    %v367 = vlaneseq
    %v368 = vshrl.u32 %v367, 7
    %v369 = vsub.s32 5, %v368
    %v370 = vrot.slane %v345, %v369
    %v371 = vlaneseq
    %v372 = vshrl.u32 %v371, 7
    %v373 = vsub.s32 6, %v372
    %v374 = vrot.slane %v345, %v373
    %v375 = vlaneseq
    %v376 = vshrl.u32 %v375, 7
    %v377 = vsub.s32 7, %v376
    %v378 = vrot.slane %v345, %v377
    %387 = vmatprep.subr.mxu0 %v88
    %388 = vmatpush1.msra.mxu0 %v87
    %389 = vmatprep.subr.mxu0 %v96
    %390 = vmatpush1.msra.mxu0 %v95
    %391 = vmatprep.subr.mxu0 %v104
    %392 = vmatpush1.msra.mxu0 %v103
    %393 = vmatprep.subr.mxu0 %v112
    %394 = vmatpush1.msra.mxu0 %v111
    %395 = vmatprep.subr.mxu0 %v120
    %396 = vmatpush1.msra.mxu0 %v119
    %397 = vmatprep.subr.mxu0 %v128
    %398 = vmatpush1.msra.mxu0 %v127
    %399 = vmatprep.subr.mxu0 %v136
    %400 = vmatpush1.msra.mxu0 %v135
    %401 = vmatprep.subr.mxu0 %v144
    %402 = vmatpush1.msra.mxu0 %v143
    %403 = vmatprep.subr.mxu0 %v152
    %404 = vmatpush1.msra.mxu0 %v151
    %405 = vmatprep.subr.mxu0 %v160
    %406 = vmatpush1.msra.mxu0 %v159
    %407 = vmatprep.subr.mxu0 %v168
    %408 = vmatpush1.msra.mxu0 %v167
    %409 = vmatprep.subr.mxu0 %v176
    %410 = vmatpush1.msra.mxu0 %v175
    %411 = vmatprep.subr.mxu0 %v184
    %412 = vmatpush1.msra.mxu0 %v183
    %413 = vmatprep.subr.mxu0 %v192
    %414 = vmatpush1.msra.mxu0 %v191
    %415 = vmatprep.subr.mxu0 %v200
    %416 = vmatpush1.msra.mxu0 %v199
    %417 = vmatprep.subr.mxu0 %v208
    %418 = vmatpush1.msra.mxu0 %v207
    %419 = vmatprep.subr.mxu0 %v216
    %420 = vmatpush1.msra.mxu0 %v215
    %421 = vmatprep.subr.mxu0 %v224
    %422 = vmatpush1.msra.mxu0 %v223
    %423 = vmatprep.subr.mxu0 %v232
    %424 = vmatpush1.msra.mxu0 %v231
    %425 = vmatprep.subr.mxu0 %v240
    %426 = vmatpush1.msra.mxu0 %v239
    %427 = vmatprep.subr.mxu0 %v248
    %428 = vmatpush1.msra.mxu0 %v247
    %429 = vmatprep.subr.mxu0 %v256
    %430 = vmatpush1.msra.mxu0 %v255
    %431 = vmatprep.subr.mxu0 %v264
    %432 = vmatpush1.msra.mxu0 %v263
    %433 = vmatprep.subr.mxu0 %v272
    %434 = vmatpush1.msra.mxu0 %v271
    %435 = vmatprep.subr.mxu0 %v280
    %436 = vmatpush1.msra.mxu0 %v279
    %437 = vmatprep.subr.mxu0 %v288
    %438 = vmatpush1.msra.mxu0 %v287
    %439 = vmatprep.subr.mxu0 %v296
    %440 = vmatpush1.msra.mxu0 %v295
    %441 = vmatprep.subr.mxu0 %v304
    %442 = vmatpush1.msra.mxu0 %v303
    %443 = vmatprep.subr.mxu0 %v312
    %444 = vmatpush1.msra.mxu0 %v311
    %445 = vmatprep.subr.mxu0 %v320
    %446 = vmatpush1.msra.mxu0 %v319
    %447 = vmatprep.subr.mxu0 %v328
    %448 = vmatpush1.msra.mxu0 %v327
    %449 = vmatprep.subr.mxu0 %v336
    %450 = vmatpush1.msra.mxu0 %v335
    %451 = vmatprep.mubr.f32.mxu0 %v86
    %452 = vmatmul.mubr.f32.gmra.mrb[0].mxu0 %v85
    %v453 = vpop.f32.mrb[0].mxu0
    %v454 = vadd.f32 %v350, %v453
    %v455 = vpop.f32.mrb[0].mxu0
    %v456 = vadd.f32 %v354, %v455
    %457 = vdwg.mxu0
    %458 = vmatprep.subr.mxu0 %v90
    %459 = vmatpush1.msra.mxu0 %v89
    %460 = vmatprep.subr.mxu0 %v98
    %461 = vmatpush1.msra.mxu0 %v97
    %462 = vmatprep.subr.mxu0 %v106
    %463 = vmatpush1.msra.mxu0 %v105
    %464 = vmatprep.subr.mxu0 %v114
    %465 = vmatpush1.msra.mxu0 %v113
    %466 = vmatprep.subr.mxu0 %v122
    %467 = vmatpush1.msra.mxu0 %v121
    %468 = vmatprep.subr.mxu0 %v130
    %469 = vmatpush1.msra.mxu0 %v129
    %470 = vmatprep.subr.mxu0 %v138
    %471 = vmatpush1.msra.mxu0 %v137
    %472 = vmatprep.subr.mxu0 %v146
    %473 = vmatpush1.msra.mxu0 %v145
    %474 = vmatprep.subr.mxu0 %v154
    %475 = vmatpush1.msra.mxu0 %v153
    %476 = vmatprep.subr.mxu0 %v162
    %477 = vmatpush1.msra.mxu0 %v161
    %478 = vmatprep.subr.mxu0 %v170
    %479 = vmatpush1.msra.mxu0 %v169
    %480 = vmatprep.subr.mxu0 %v178
    %481 = vmatpush1.msra.mxu0 %v177
    %482 = vmatprep.subr.mxu0 %v186
    %483 = vmatpush1.msra.mxu0 %v185
    %484 = vmatprep.subr.mxu0 %v194
    %485 = vmatpush1.msra.mxu0 %v193
    %486 = vmatprep.subr.mxu0 %v202
    %487 = vmatpush1.msra.mxu0 %v201
    %488 = vmatprep.subr.mxu0 %v210
    %489 = vmatpush1.msra.mxu0 %v209
    %490 = vmatprep.subr.mxu0 %v218
    %491 = vmatpush1.msra.mxu0 %v217
    %492 = vmatprep.subr.mxu0 %v226
    %493 = vmatpush1.msra.mxu0 %v225
    %494 = vmatprep.subr.mxu0 %v234
    %495 = vmatpush1.msra.mxu0 %v233
    %496 = vmatprep.subr.mxu0 %v242
    %497 = vmatpush1.msra.mxu0 %v241
    %498 = vmatprep.subr.mxu0 %v250
    %499 = vmatpush1.msra.mxu0 %v249
    %500 = vmatprep.subr.mxu0 %v258
    %501 = vmatpush1.msra.mxu0 %v257
    %502 = vmatprep.subr.mxu0 %v266
    %503 = vmatpush1.msra.mxu0 %v265
    %504 = vmatprep.subr.mxu0 %v274
    %505 = vmatpush1.msra.mxu0 %v273
    %506 = vmatprep.subr.mxu0 %v282
    %507 = vmatpush1.msra.mxu0 %v281
    %508 = vmatprep.subr.mxu0 %v290
    %509 = vmatpush1.msra.mxu0 %v289
    %510 = vmatprep.subr.mxu0 %v298
    %511 = vmatpush1.msra.mxu0 %v297
    %512 = vmatprep.subr.mxu0 %v306
    %513 = vmatpush1.msra.mxu0 %v305
    %514 = vmatprep.subr.mxu0 %v314
    %515 = vmatpush1.msra.mxu0 %v313
    %516 = vmatprep.subr.mxu0 %v322
    %517 = vmatpush1.msra.mxu0 %v321
    %518 = vmatprep.subr.mxu0 %v330
    %519 = vmatpush1.msra.mxu0 %v329
    %520 = vmatprep.subr.mxu0 %v338
    %521 = vmatpush1.msra.mxu0 %v337
    %522 = vmatprep.mubr.f32.mxu0 %v86
    %523 = vmatmul.mubr.f32.gmra.mrb[0].mxu0 %v85
    %v524 = vpop.f32.mrb[0].mxu0
    %v525 = vadd.f32 %v358, %v524
    %v526 = vpop.f32.mrb[0].mxu0
    %v527 = vadd.f32 %v362, %v526
    %528 = vdwg.mxu0
    %529 = vmatprep.subr.mxu0 %v92
    %530 = vmatpush1.msra.mxu0 %v91
    %531 = vmatprep.subr.mxu0 %v100
    %532 = vmatpush1.msra.mxu0 %v99
    %533 = vmatprep.subr.mxu0 %v108
    %534 = vmatpush1.msra.mxu0 %v107
    %535 = vmatprep.subr.mxu0 %v116
    %536 = vmatpush1.msra.mxu0 %v115
    %537 = vmatprep.subr.mxu0 %v124
    %538 = vmatpush1.msra.mxu0 %v123
    %539 = vmatprep.subr.mxu0 %v132
    %540 = vmatpush1.msra.mxu0 %v131
    %541 = vmatprep.subr.mxu0 %v140
    %542 = vmatpush1.msra.mxu0 %v139
    %543 = vmatprep.subr.mxu0 %v148
    %544 = vmatpush1.msra.mxu0 %v147
    %545 = vmatprep.subr.mxu0 %v156
    %546 = vmatpush1.msra.mxu0 %v155
    %547 = vmatprep.subr.mxu0 %v164
    %548 = vmatpush1.msra.mxu0 %v163
    %549 = vmatprep.subr.mxu0 %v172
    %550 = vmatpush1.msra.mxu0 %v171
    %551 = vmatprep.subr.mxu0 %v180
    %552 = vmatpush1.msra.mxu0 %v179
    %553 = vmatprep.subr.mxu0 %v188
    %554 = vmatpush1.msra.mxu0 %v187
    %555 = vmatprep.subr.mxu0 %v196
    %556 = vmatpush1.msra.mxu0 %v195
    %557 = vmatprep.subr.mxu0 %v204
    %558 = vmatpush1.msra.mxu0 %v203
    %559 = vmatprep.subr.mxu0 %v212
    %560 = vmatpush1.msra.mxu0 %v211
    %561 = vmatprep.subr.mxu0 %v220
    %562 = vmatpush1.msra.mxu0 %v219
    %563 = vmatprep.subr.mxu0 %v228
    %564 = vmatpush1.msra.mxu0 %v227
    %565 = vmatprep.subr.mxu0 %v236
    %566 = vmatpush1.msra.mxu0 %v235
    %567 = vmatprep.subr.mxu0 %v244
    %568 = vmatpush1.msra.mxu0 %v243
    %569 = vmatprep.subr.mxu0 %v252
    %570 = vmatpush1.msra.mxu0 %v251
    %571 = vmatprep.subr.mxu0 %v260
    %572 = vmatpush1.msra.mxu0 %v259
    %573 = vmatprep.subr.mxu0 %v268
    %574 = vmatpush1.msra.mxu0 %v267
    %575 = vmatprep.subr.mxu0 %v276
    %576 = vmatpush1.msra.mxu0 %v275
    %577 = vmatprep.subr.mxu0 %v284
    %578 = vmatpush1.msra.mxu0 %v283
    %579 = vmatprep.subr.mxu0 %v292
    %580 = vmatpush1.msra.mxu0 %v291
    %581 = vmatprep.subr.mxu0 %v300
    %582 = vmatpush1.msra.mxu0 %v299
    %583 = vmatprep.subr.mxu0 %v308
    %584 = vmatpush1.msra.mxu0 %v307
    %585 = vmatprep.subr.mxu0 %v316
    %586 = vmatpush1.msra.mxu0 %v315
    %587 = vmatprep.subr.mxu0 %v324
    %588 = vmatpush1.msra.mxu0 %v323
    %589 = vmatprep.subr.mxu0 %v332
    %590 = vmatpush1.msra.mxu0 %v331
    %591 = vmatprep.subr.mxu0 %v340
    %592 = vmatpush1.msra.mxu0 %v339
    %593 = vmatprep.mubr.f32.mxu0 %v86
    %594 = vmatmul.mubr.f32.gmra.mrb[0].mxu0 %v85
    %v595 = vpop.f32.mrb[0].mxu0
    %v596 = vadd.f32 %v366, %v595
    %v597 = vpop.f32.mrb[0].mxu0
    %v598 = vadd.f32 %v370, %v597
    %599 = vdwg.mxu0
    %600 = vmatprep.subr.mxu0 %v94
    %601 = vmatpush1.msra.mxu0 %v93
    %602 = vmatprep.subr.mxu0 %v102
    %603 = vmatpush1.msra.mxu0 %v101
    %604 = vmatprep.subr.mxu0 %v110
    %605 = vmatpush1.msra.mxu0 %v109
    %606 = vmatprep.subr.mxu0 %v118
    %607 = vmatpush1.msra.mxu0 %v117
    %608 = vmatprep.subr.mxu0 %v126
    %609 = vmatpush1.msra.mxu0 %v125
    %610 = vmatprep.subr.mxu0 %v134
    %611 = vmatpush1.msra.mxu0 %v133
    %612 = vmatprep.subr.mxu0 %v142
    %613 = vmatpush1.msra.mxu0 %v141
    %614 = vmatprep.subr.mxu0 %v150
    %615 = vmatpush1.msra.mxu0 %v149
    %616 = vmatprep.subr.mxu0 %v158
    %617 = vmatpush1.msra.mxu0 %v157
    %618 = vmatprep.subr.mxu0 %v166
    %619 = vmatpush1.msra.mxu0 %v165
    %620 = vmatprep.subr.mxu0 %v174
    %621 = vmatpush1.msra.mxu0 %v173
    %622 = vmatprep.subr.mxu0 %v182
    %623 = vmatpush1.msra.mxu0 %v181
    %624 = vmatprep.subr.mxu0 %v190
    %625 = vmatpush1.msra.mxu0 %v189
    %626 = vmatprep.subr.mxu0 %v198
    %627 = vmatpush1.msra.mxu0 %v197
    %628 = vmatprep.subr.mxu0 %v206
    %629 = vmatpush1.msra.mxu0 %v205
    %630 = vmatprep.subr.mxu0 %v214
    %631 = vmatpush1.msra.mxu0 %v213
    %632 = vmatprep.subr.mxu0 %v222
    %633 = vmatpush1.msra.mxu0 %v221
    %634 = vmatprep.subr.mxu0 %v230
    %635 = vmatpush1.msra.mxu0 %v229
    %636 = vmatprep.subr.mxu0 %v238
    %637 = vmatpush1.msra.mxu0 %v237
    %638 = vmatprep.subr.mxu0 %v246
    %639 = vmatpush1.msra.mxu0 %v245
    %640 = vmatprep.subr.mxu0 %v254
    %641 = vmatpush1.msra.mxu0 %v253
    %642 = vmatprep.subr.mxu0 %v262
    %643 = vmatpush1.msra.mxu0 %v261
    %644 = vmatprep.subr.mxu0 %v270
    %645 = vmatpush1.msra.mxu0 %v269
    %646 = vmatprep.subr.mxu0 %v278
    %647 = vmatpush1.msra.mxu0 %v277
    %648 = vmatprep.subr.mxu0 %v286
    %649 = vmatpush1.msra.mxu0 %v285
    %650 = vmatprep.subr.mxu0 %v294
    %651 = vmatpush1.msra.mxu0 %v293
    %652 = vmatprep.subr.mxu0 %v302
    %653 = vmatpush1.msra.mxu0 %v301
    %654 = vmatprep.subr.mxu0 %v310
    %655 = vmatpush1.msra.mxu0 %v309
    %656 = vmatprep.subr.mxu0 %v318
    %657 = vmatpush1.msra.mxu0 %v317
    %658 = vmatprep.subr.mxu0 %v326
    %659 = vmatpush1.msra.mxu0 %v325
    %660 = vmatprep.subr.mxu0 %v334
    %661 = vmatpush1.msra.mxu0 %v333
    %662 = vmatprep.subr.mxu0 %v342
    %663 = vmatpush1.msra.mxu0 %v341
    %664 = vmatprep.mubr.f32.mxu0 %v86
    %665 = vmatmul.mubr.f32.gmra.mrb[0].mxu0 %v85
    %v666 = vpop.f32.mrb[0].mxu0
    %v667 = vadd.f32 %v374, %v666
    %v668 = vpop.f32.mrb[0].mxu0
    %v669 = vadd.f32 %v378, %v668
    %670 = vdwg.mxu0
    %v671 = vmax.f32 %v454, 0.0
    %v672 = vmax.f32 %v456, 0.0
    %v673 = vmax.f32 %v525, 0.0
    %v674 = vmax.f32 %v527, 0.0
    %v675 = vmax.f32 %v596, 0.0
    %v676 = vmax.f32 %v598, 0.0
    %v677 = vmax.f32 %v667, 0.0
    %v678 = vmax.f32 %v669, 0.0
    %v679 = vld [vmem:[#allocation7] sm:$0xff]
    %v680 = vld [vmem:[#allocation7 + $0x8] sm:$0xff]
    %v681 = vld [vmem:[#allocation7 + $0x10] sm:$0xff]
    %v682 = vld [vmem:[#allocation7 + $0x18] sm:$0xff]
    %v683 = vld [vmem:[#allocation7 + $0x20] sm:$0xff]
    %v684 = vld [vmem:[#allocation7 + $0x28] sm:$0xff]
    %v685 = vld [vmem:[#allocation7 + $0x30] sm:$0xff]
    %v686 = vld [vmem:[#allocation7 + $0x38] sm:$0xff]
    %v687 = vld [vmem:[#allocation7 + $0x40] sm:$0xff]
    %v688 = vld [vmem:[#allocation7 + $0x48] sm:$0xff]
    %v689 = vld [vmem:[#allocation7 + $0x50] sm:$0xff]
    %v690 = vld [vmem:[#allocation7 + $0x58] sm:$0xff]
    %v691 = vld [vmem:[#allocation7 + $0x60] sm:$0xff]
    %v692 = vld [vmem:[#allocation7 + $0x68] sm:$0xff]
    %v693 = vld [vmem:[#allocation7 + $0x70] sm:$0xff]
    %v694 = vld [vmem:[#allocation7 + $0x78] sm:$0xff]
    %v695 = vld [vmem:[#allocation7 + $0x80] sm:$0xff]
    %v696 = vld [vmem:[#allocation7 + $0x88] sm:$0xff]
    %v697 = vld [vmem:[#allocation7 + $0x90] sm:$0xff]
    %v698 = vld [vmem:[#allocation7 + $0x98] sm:$0xff]
    %v699 = vld [vmem:[#allocation7 + $0xa0] sm:$0xff]
    %v700 = vld [vmem:[#allocation7 + $0xa8] sm:$0xff]
    %v701 = vld [vmem:[#allocation7 + $0xb0] sm:$0xff]
    %v702 = vld [vmem:[#allocation7 + $0xb8] sm:$0xff]
    %v703 = vld [vmem:[#allocation7 + $0xc0] sm:$0xff]
    %v704 = vld [vmem:[#allocation7 + $0xc8] sm:$0xff]
    %v705 = vld [vmem:[#allocation7 + $0xd0] sm:$0xff]
    %v706 = vld [vmem:[#allocation7 + $0xd8] sm:$0xff]
    %v707 = vld [vmem:[#allocation7 + $0xe0] sm:$0xff]
    %v708 = vld [vmem:[#allocation7 + $0xe8] sm:$0xff]
    %v709 = vld [vmem:[#allocation7 + $0xf0] sm:$0xff]
    %v710 = vld [vmem:[#allocation7 + $0xf8] sm:$0xff]
    %v711 = vld [vmem:[#allocation7 + $0x100] sm:$0xff]
    %v712 = vld [vmem:[#allocation7 + $0x108] sm:$0xff]
    %v713 = vld [vmem:[#allocation7 + $0x110] sm:$0xff]
    %v714 = vld [vmem:[#allocation7 + $0x118] sm:$0xff]
    %v715 = vld [vmem:[#allocation7 + $0x120] sm:$0xff]
    %v716 = vld [vmem:[#allocation7 + $0x128] sm:$0xff]
    %v717 = vld [vmem:[#allocation7 + $0x130] sm:$0xff]
    %v718 = vld [vmem:[#allocation7 + $0x138] sm:$0xff]
    %v719 = vld [vmem:[#allocation7 + $0x140] sm:$0xff]
    %v720 = vld [vmem:[#allocation7 + $0x148] sm:$0xff]
    %v721 = vld [vmem:[#allocation7 + $0x150] sm:$0xff]
    %v722 = vld [vmem:[#allocation7 + $0x158] sm:$0xff]
    %v723 = vld [vmem:[#allocation7 + $0x160] sm:$0xff]
    %v724 = vld [vmem:[#allocation7 + $0x168] sm:$0xff]
    %v725 = vld [vmem:[#allocation7 + $0x170] sm:$0xff]
    %v726 = vld [vmem:[#allocation7 + $0x178] sm:$0xff]
    %v727 = vld [vmem:[#allocation7 + $0x180] sm:$0xff]
    %v728 = vld [vmem:[#allocation7 + $0x188] sm:$0xff]
    %v729 = vld [vmem:[#allocation7 + $0x190] sm:$0xff]
    %v730 = vld [vmem:[#allocation7 + $0x198] sm:$0xff]
    %v731 = vld [vmem:[#allocation7 + $0x1a0] sm:$0xff]
    %v732 = vld [vmem:[#allocation7 + $0x1a8] sm:$0xff]
    %v733 = vld [vmem:[#allocation7 + $0x1b0] sm:$0xff]
    %v734 = vld [vmem:[#allocation7 + $0x1b8] sm:$0xff]
    %v735 = vld [vmem:[#allocation7 + $0x1c0] sm:$0xff]
    %v736 = vld [vmem:[#allocation7 + $0x1c8] sm:$0xff]
    %v737 = vld [vmem:[#allocation7 + $0x1d0] sm:$0xff]
    %v738 = vld [vmem:[#allocation7 + $0x1d8] sm:$0xff]
    %v739 = vld [vmem:[#allocation7 + $0x1e0] sm:$0xff]
    %v740 = vld [vmem:[#allocation7 + $0x1e8] sm:$0xff]
    %v741 = vld [vmem:[#allocation7 + $0x1f0] sm:$0xff]
    %v742 = vld [vmem:[#allocation7 + $0x1f8] sm:$0xff]
    %v743 = vld [vmem:[#allocation7 + $0x200] sm:$0xff]
    %v744 = vld [vmem:[#allocation7 + $0x208] sm:$0xff]
    %v745 = vld [vmem:[#allocation7 + $0x210] sm:$0xff]
    %v746 = vld [vmem:[#allocation7 + $0x218] sm:$0xff]
    %v747 = vld [vmem:[#allocation7 + $0x220] sm:$0xff]
    %v748 = vld [vmem:[#allocation7 + $0x228] sm:$0xff]
    %v749 = vld [vmem:[#allocation7 + $0x230] sm:$0xff]
    %v750 = vld [vmem:[#allocation7 + $0x238] sm:$0xff]
    %v751 = vld [vmem:[#allocation7 + $0x240] sm:$0xff]
    %v752 = vld [vmem:[#allocation7 + $0x248] sm:$0xff]
    %v753 = vld [vmem:[#allocation7 + $0x250] sm:$0xff]
    %v754 = vld [vmem:[#allocation7 + $0x258] sm:$0xff]
    %v755 = vld [vmem:[#allocation7 + $0x260] sm:$0xff]
    %v756 = vld [vmem:[#allocation7 + $0x268] sm:$0xff]
    %v757 = vld [vmem:[#allocation7 + $0x270] sm:$0xff]
    %v758 = vld [vmem:[#allocation7 + $0x278] sm:$0xff]
    %v759 = vld [vmem:[#allocation7 + $0x280] sm:$0xff]
    %v760 = vld [vmem:[#allocation7 + $0x288] sm:$0xff]
    %v761 = vld [vmem:[#allocation7 + $0x290] sm:$0xff]
    %v762 = vld [vmem:[#allocation7 + $0x298] sm:$0xff]
    %v763 = vld [vmem:[#allocation7 + $0x2a0] sm:$0xff]
    %v764 = vld [vmem:[#allocation7 + $0x2a8] sm:$0xff]
    %v765 = vld [vmem:[#allocation7 + $0x2b0] sm:$0xff]
    %v766 = vld [vmem:[#allocation7 + $0x2b8] sm:$0xff]
    %v767 = vld [vmem:[#allocation7 + $0x2c0] sm:$0xff]
    %v768 = vld [vmem:[#allocation7 + $0x2c8] sm:$0xff]
    %v769 = vld [vmem:[#allocation7 + $0x2d0] sm:$0xff]
    %v770 = vld [vmem:[#allocation7 + $0x2d8] sm:$0xff]
    %v771 = vld [vmem:[#allocation7 + $0x2e0] sm:$0xff]
    %v772 = vld [vmem:[#allocation7 + $0x2e8] sm:$0xff]
    %v773 = vld [vmem:[#allocation7 + $0x2f0] sm:$0xff]
    %v774 = vld [vmem:[#allocation7 + $0x2f8] sm:$0xff]
    %v775 = vld [vmem:[#allocation7 + $0x300] sm:$0xff]
    %v776 = vld [vmem:[#allocation7 + $0x308] sm:$0xff]
    %v777 = vld [vmem:[#allocation7 + $0x310] sm:$0xff]
    %v778 = vld [vmem:[#allocation7 + $0x318] sm:$0xff]
    %v779 = vld [vmem:[#allocation7 + $0x320] sm:$0xff]
    %v780 = vld [vmem:[#allocation7 + $0x328] sm:$0xff]
    %v781 = vld [vmem:[#allocation7 + $0x330] sm:$0xff]
    %v782 = vld [vmem:[#allocation7 + $0x338] sm:$0xff]
    %v783 = vld [vmem:[#allocation7 + $0x340] sm:$0xff]
    %v784 = vld [vmem:[#allocation7 + $0x348] sm:$0xff]
    %v785 = vld [vmem:[#allocation7 + $0x350] sm:$0xff]
    %v786 = vld [vmem:[#allocation7 + $0x358] sm:$0xff]
    %v787 = vld [vmem:[#allocation7 + $0x360] sm:$0xff]
    %v788 = vld [vmem:[#allocation7 + $0x368] sm:$0xff]
    %v789 = vld [vmem:[#allocation7 + $0x370] sm:$0xff]
    %v790 = vld [vmem:[#allocation7 + $0x378] sm:$0xff]
    %v791 = vld [vmem:[#allocation7 + $0x380] sm:$0xff]
    %v792 = vld [vmem:[#allocation7 + $0x388] sm:$0xff]
    %v793 = vld [vmem:[#allocation7 + $0x390] sm:$0xff]
    %v794 = vld [vmem:[#allocation7 + $0x398] sm:$0xff]
    %v795 = vld [vmem:[#allocation7 + $0x3a0] sm:$0xff]
    %v796 = vld [vmem:[#allocation7 + $0x3a8] sm:$0xff]
    %v797 = vld [vmem:[#allocation7 + $0x3b0] sm:$0xff]
    %v798 = vld [vmem:[#allocation7 + $0x3b8] sm:$0xff]
    %v799 = vld [vmem:[#allocation7 + $0x3c0] sm:$0xff]
    %v800 = vld [vmem:[#allocation7 + $0x3c8] sm:$0xff]
    %v801 = vld [vmem:[#allocation7 + $0x3d0] sm:$0xff]
    %v802 = vld [vmem:[#allocation7 + $0x3d8] sm:$0xff]
    %v803 = vld [vmem:[#allocation7 + $0x3e0] sm:$0xff]
    %v804 = vld [vmem:[#allocation7 + $0x3e8] sm:$0xff]
    %v805 = vld [vmem:[#allocation7 + $0x3f0] sm:$0xff]
    %v806 = vld [vmem:[#allocation7 + $0x3f8] sm:$0xff]
    %v807 = vld [vmem:[#allocation7 + $0x400] sm:$0xff]
    %v808 = vld [vmem:[#allocation7 + $0x408] sm:$0xff]
    %v809 = vld [vmem:[#allocation7 + $0x410] sm:$0xff]
    %v810 = vld [vmem:[#allocation7 + $0x418] sm:$0xff]
    %v811 = vld [vmem:[#allocation7 + $0x420] sm:$0xff]
    %v812 = vld [vmem:[#allocation7 + $0x428] sm:$0xff]
    %v813 = vld [vmem:[#allocation7 + $0x430] sm:$0xff]
    %v814 = vld [vmem:[#allocation7 + $0x438] sm:$0xff]
    %v815 = vld [vmem:[#allocation7 + $0x440] sm:$0xff]
    %v816 = vld [vmem:[#allocation7 + $0x448] sm:$0xff]
    %v817 = vld [vmem:[#allocation7 + $0x450] sm:$0xff]
    %v818 = vld [vmem:[#allocation7 + $0x458] sm:$0xff]
    %v819 = vld [vmem:[#allocation7 + $0x460] sm:$0xff]
    %v820 = vld [vmem:[#allocation7 + $0x468] sm:$0xff]
    %v821 = vld [vmem:[#allocation7 + $0x470] sm:$0xff]
    %v822 = vld [vmem:[#allocation7 + $0x478] sm:$0xff]
    %v823 = vld [vmem:[#allocation7 + $0x480] sm:$0xff]
    %v824 = vld [vmem:[#allocation7 + $0x488] sm:$0xff]
    %v825 = vld [vmem:[#allocation7 + $0x490] sm:$0xff]
    %v826 = vld [vmem:[#allocation7 + $0x498] sm:$0xff]
    %v827 = vld [vmem:[#allocation7 + $0x4a0] sm:$0xff]
    %v828 = vld [vmem:[#allocation7 + $0x4a8] sm:$0xff]
    %v829 = vld [vmem:[#allocation7 + $0x4b0] sm:$0xff]
    %v830 = vld [vmem:[#allocation7 + $0x4b8] sm:$0xff]
    %v831 = vld [vmem:[#allocation7 + $0x4c0] sm:$0xff]
    %v832 = vld [vmem:[#allocation7 + $0x4c8] sm:$0xff]
    %v833 = vld [vmem:[#allocation7 + $0x4d0] sm:$0xff]
    %v834 = vld [vmem:[#allocation7 + $0x4d8] sm:$0xff]
    %v835 = vld [vmem:[#allocation7 + $0x4e0] sm:$0xff]
    %v836 = vld [vmem:[#allocation7 + $0x4e8] sm:$0xff]
    %v837 = vld [vmem:[#allocation7 + $0x4f0] sm:$0xff]
    %v838 = vld [vmem:[#allocation7 + $0x4f8] sm:$0xff]
    %v839 = vld [vmem:[#allocation7 + $0x500] sm:$0xff]
    %v840 = vld [vmem:[#allocation7 + $0x508] sm:$0xff]
    %v841 = vld [vmem:[#allocation7 + $0x510] sm:$0xff]
    %v842 = vld [vmem:[#allocation7 + $0x518] sm:$0xff]
    %v843 = vld [vmem:[#allocation7 + $0x520] sm:$0xff]
    %v844 = vld [vmem:[#allocation7 + $0x528] sm:$0xff]
    %v845 = vld [vmem:[#allocation7 + $0x530] sm:$0xff]
    %v846 = vld [vmem:[#allocation7 + $0x538] sm:$0xff]
    %v847 = vld [vmem:[#allocation7 + $0x540] sm:$0xff]
    %v848 = vld [vmem:[#allocation7 + $0x548] sm:$0xff]
    %v849 = vld [vmem:[#allocation7 + $0x550] sm:$0xff]
    %v850 = vld [vmem:[#allocation7 + $0x558] sm:$0xff]
    %v851 = vld [vmem:[#allocation7 + $0x560] sm:$0xff]
    %v852 = vld [vmem:[#allocation7 + $0x568] sm:$0xff]
    %v853 = vld [vmem:[#allocation7 + $0x570] sm:$0xff]
    %v854 = vld [vmem:[#allocation7 + $0x578] sm:$0xff]
    %v855 = vld [vmem:[#allocation7 + $0x580] sm:$0xff]
    %v856 = vld [vmem:[#allocation7 + $0x588] sm:$0xff]
    %v857 = vld [vmem:[#allocation7 + $0x590] sm:$0xff]
    %v858 = vld [vmem:[#allocation7 + $0x598] sm:$0xff]
    %v859 = vld [vmem:[#allocation7 + $0x5a0] sm:$0xff]
    %v860 = vld [vmem:[#allocation7 + $0x5a8] sm:$0xff]
    %v861 = vld [vmem:[#allocation7 + $0x5b0] sm:$0xff]
    %v862 = vld [vmem:[#allocation7 + $0x5b8] sm:$0xff]
    %v863 = vld [vmem:[#allocation7 + $0x5c0] sm:$0xff]
    %v864 = vld [vmem:[#allocation7 + $0x5c8] sm:$0xff]
    %v865 = vld [vmem:[#allocation7 + $0x5d0] sm:$0xff]
    %v866 = vld [vmem:[#allocation7 + $0x5d8] sm:$0xff]
    %v867 = vld [vmem:[#allocation7 + $0x5e0] sm:$0xff]
    %v868 = vld [vmem:[#allocation7 + $0x5e8] sm:$0xff]
    %v869 = vld [vmem:[#allocation7 + $0x5f0] sm:$0xff]
    %v870 = vld [vmem:[#allocation7 + $0x5f8] sm:$0xff]
    %v871 = vld [vmem:[#allocation7 + $0x600] sm:$0xff]
    %v872 = vld [vmem:[#allocation7 + $0x608] sm:$0xff]
    %v873 = vld [vmem:[#allocation7 + $0x610] sm:$0xff]
    %v874 = vld [vmem:[#allocation7 + $0x618] sm:$0xff]
    %v875 = vld [vmem:[#allocation7 + $0x620] sm:$0xff]
    %v876 = vld [vmem:[#allocation7 + $0x628] sm:$0xff]
    %v877 = vld [vmem:[#allocation7 + $0x630] sm:$0xff]
    %v878 = vld [vmem:[#allocation7 + $0x638] sm:$0xff]
    %v879 = vld [vmem:[#allocation7 + $0x640] sm:$0xff]
    %v880 = vld [vmem:[#allocation7 + $0x648] sm:$0xff]
    %v881 = vld [vmem:[#allocation7 + $0x650] sm:$0xff]
    %v882 = vld [vmem:[#allocation7 + $0x658] sm:$0xff]
    %v883 = vld [vmem:[#allocation7 + $0x660] sm:$0xff]
    %v884 = vld [vmem:[#allocation7 + $0x668] sm:$0xff]
    %v885 = vld [vmem:[#allocation7 + $0x670] sm:$0xff]
    %v886 = vld [vmem:[#allocation7 + $0x678] sm:$0xff]
    %v887 = vld [vmem:[#allocation7 + $0x680] sm:$0xff]
    %v888 = vld [vmem:[#allocation7 + $0x688] sm:$0xff]
    %v889 = vld [vmem:[#allocation7 + $0x690] sm:$0xff]
    %v890 = vld [vmem:[#allocation7 + $0x698] sm:$0xff]
    %v891 = vld [vmem:[#allocation7 + $0x6a0] sm:$0xff]
    %v892 = vld [vmem:[#allocation7 + $0x6a8] sm:$0xff]
    %v893 = vld [vmem:[#allocation7 + $0x6b0] sm:$0xff]
    %v894 = vld [vmem:[#allocation7 + $0x6b8] sm:$0xff]
    %v895 = vld [vmem:[#allocation7 + $0x6c0] sm:$0xff]
    %v896 = vld [vmem:[#allocation7 + $0x6c8] sm:$0xff]
    %v897 = vld [vmem:[#allocation7 + $0x6d0] sm:$0xff]
    %v898 = vld [vmem:[#allocation7 + $0x6d8] sm:$0xff]
    %v899 = vld [vmem:[#allocation7 + $0x6e0] sm:$0xff]
    %v900 = vld [vmem:[#allocation7 + $0x6e8] sm:$0xff]
    %v901 = vld [vmem:[#allocation7 + $0x6f0] sm:$0xff]
    %v902 = vld [vmem:[#allocation7 + $0x6f8] sm:$0xff]
    %v903 = vld [vmem:[#allocation7 + $0x700] sm:$0xff]
    %v904 = vld [vmem:[#allocation7 + $0x708] sm:$0xff]
    %v905 = vld [vmem:[#allocation7 + $0x710] sm:$0xff]
    %v906 = vld [vmem:[#allocation7 + $0x718] sm:$0xff]
    %v907 = vld [vmem:[#allocation7 + $0x720] sm:$0xff]
    %v908 = vld [vmem:[#allocation7 + $0x728] sm:$0xff]
    %v909 = vld [vmem:[#allocation7 + $0x730] sm:$0xff]
    %v910 = vld [vmem:[#allocation7 + $0x738] sm:$0xff]
    %v911 = vld [vmem:[#allocation7 + $0x740] sm:$0xff]
    %v912 = vld [vmem:[#allocation7 + $0x748] sm:$0xff]
    %v913 = vld [vmem:[#allocation7 + $0x750] sm:$0xff]
    %v914 = vld [vmem:[#allocation7 + $0x758] sm:$0xff]
    %v915 = vld [vmem:[#allocation7 + $0x760] sm:$0xff]
    %v916 = vld [vmem:[#allocation7 + $0x768] sm:$0xff]
    %v917 = vld [vmem:[#allocation7 + $0x770] sm:$0xff]
    %v918 = vld [vmem:[#allocation7 + $0x778] sm:$0xff]
    %v919 = vld [vmem:[#allocation7 + $0x780] sm:$0xff]
    %v920 = vld [vmem:[#allocation7 + $0x788] sm:$0xff]
    %v921 = vld [vmem:[#allocation7 + $0x790] sm:$0xff]
    %v922 = vld [vmem:[#allocation7 + $0x798] sm:$0xff]
    %v923 = vld [vmem:[#allocation7 + $0x7a0] sm:$0xff]
    %v924 = vld [vmem:[#allocation7 + $0x7a8] sm:$0xff]
    %v925 = vld [vmem:[#allocation7 + $0x7b0] sm:$0xff]
    %v926 = vld [vmem:[#allocation7 + $0x7b8] sm:$0xff]
    %v927 = vld [vmem:[#allocation7 + $0x7c0] sm:$0xff]
    %v928 = vld [vmem:[#allocation7 + $0x7c8] sm:$0xff]
    %v929 = vld [vmem:[#allocation7 + $0x7d0] sm:$0xff]
    %v930 = vld [vmem:[#allocation7 + $0x7d8] sm:$0xff]
    %v931 = vld [vmem:[#allocation7 + $0x7e0] sm:$0xff]
    %v932 = vld [vmem:[#allocation7 + $0x7e8] sm:$0xff]
    %v933 = vld [vmem:[#allocation7 + $0x7f0] sm:$0xff]
    %v934 = vld [vmem:[#allocation7 + $0x7f8] sm:$0xff]
    %s935 = scalar_lea.vmem [#allocation10], 1
    %v936 = vld [vmem:[%s935] ss:$8 sm:$0x3]
    %v938 = vlaneseq
    %v939 = vshrl.u32 %v938, 7
    %v940 = vsub.s32 0, %v939
    %v941 = vrot.slane %v936, %v940
    %v942 = vlaneseq
    %v943 = vshrl.u32 %v942, 7
    %v944 = vsub.s32 1, %v943
    %v945 = vrot.slane %v936, %v944
    %948 = vmatprep.subr.mxu0 %v680
    %949 = vmatpush1.msra.mxu0 %v679
    %950 = vmatprep.subr.mxu0 %v682
    %951 = vmatpush1.msra.mxu0 %v681
    %952 = vmatprep.subr.mxu0 %v684
    %953 = vmatpush1.msra.mxu0 %v683
    %954 = vmatprep.subr.mxu0 %v686
    %955 = vmatpush1.msra.mxu0 %v685
    %956 = vmatprep.subr.mxu0 %v688
    %957 = vmatpush1.msra.mxu0 %v687
    %958 = vmatprep.subr.mxu0 %v690
    %959 = vmatpush1.msra.mxu0 %v689
    %960 = vmatprep.subr.mxu0 %v692
    %961 = vmatpush1.msra.mxu0 %v691
    %962 = vmatprep.subr.mxu0 %v694
    %963 = vmatpush1.msra.mxu0 %v693
    %964 = vmatprep.subr.mxu0 %v696
    %965 = vmatpush1.msra.mxu0 %v695
    %966 = vmatprep.subr.mxu0 %v698
    %967 = vmatpush1.msra.mxu0 %v697
    %968 = vmatprep.subr.mxu0 %v700
    %969 = vmatpush1.msra.mxu0 %v699
    %970 = vmatprep.subr.mxu0 %v702
    %971 = vmatpush1.msra.mxu0 %v701
    %972 = vmatprep.subr.mxu0 %v704
    %973 = vmatpush1.msra.mxu0 %v703
    %974 = vmatprep.subr.mxu0 %v706
    %975 = vmatpush1.msra.mxu0 %v705
    %976 = vmatprep.subr.mxu0 %v708
    %977 = vmatpush1.msra.mxu0 %v707
    %978 = vmatprep.subr.mxu0 %v710
    %979 = vmatpush1.msra.mxu0 %v709
    %980 = vmatprep.subr.mxu0 %v712
    %981 = vmatpush1.msra.mxu0 %v711
    %982 = vmatprep.subr.mxu0 %v714
    %983 = vmatpush1.msra.mxu0 %v713
    %984 = vmatprep.subr.mxu0 %v716
    %985 = vmatpush1.msra.mxu0 %v715
    %986 = vmatprep.subr.mxu0 %v718
    %987 = vmatpush1.msra.mxu0 %v717
    %988 = vmatprep.subr.mxu0 %v720
    %989 = vmatpush1.msra.mxu0 %v719
    %990 = vmatprep.subr.mxu0 %v722
    %991 = vmatpush1.msra.mxu0 %v721
    %992 = vmatprep.subr.mxu0 %v724
    %993 = vmatpush1.msra.mxu0 %v723
    %994 = vmatprep.subr.mxu0 %v726
    %995 = vmatpush1.msra.mxu0 %v725
    %996 = vmatprep.subr.mxu0 %v728
    %997 = vmatpush1.msra.mxu0 %v727
    %998 = vmatprep.subr.mxu0 %v730
    %999 = vmatpush1.msra.mxu0 %v729
    %1000 = vmatprep.subr.mxu0 %v732
    %1001 = vmatpush1.msra.mxu0 %v731
    %1002 = vmatprep.subr.mxu0 %v734
    %1003 = vmatpush1.msra.mxu0 %v733
    %1004 = vmatprep.subr.mxu0 %v736
    %1005 = vmatpush1.msra.mxu0 %v735
    %1006 = vmatprep.subr.mxu0 %v738
    %1007 = vmatpush1.msra.mxu0 %v737
    %1008 = vmatprep.subr.mxu0 %v740
    %1009 = vmatpush1.msra.mxu0 %v739
    %1010 = vmatprep.subr.mxu0 %v742
    %1011 = vmatpush1.msra.mxu0 %v741
    %1012 = vmatprep.mubr.f32.mxu0 %v672
    %1013 = vmatmul.mubr.f32.gmra.mrb[0].mxu0 %v671
    %v1014 = vpop.f32.mrb[0].mxu0
    %v1015 = vadd.f32 %v941, %v1014
    %v1016 = vpop.f32.mrb[0].mxu0
    %v1017 = vadd.f32 %v945, %v1016
    %1018 = vdwg.mxu0
    %1019 = vmatprep.subr.mxu0 %v744
    %1020 = vmatpush1.msra.mxu0 %v743
    %1021 = vmatprep.subr.mxu0 %v746
    %1022 = vmatpush1.msra.mxu0 %v745
    %1023 = vmatprep.subr.mxu0 %v748
    %1024 = vmatpush1.msra.mxu0 %v747
    %1025 = vmatprep.subr.mxu0 %v750
    %1026 = vmatpush1.msra.mxu0 %v749
    %1027 = vmatprep.subr.mxu0 %v752
    %1028 = vmatpush1.msra.mxu0 %v751
    %1029 = vmatprep.subr.mxu0 %v754
    %1030 = vmatpush1.msra.mxu0 %v753
    %1031 = vmatprep.subr.mxu0 %v756
    %1032 = vmatpush1.msra.mxu0 %v755
    %1033 = vmatprep.subr.mxu0 %v758
    %1034 = vmatpush1.msra.mxu0 %v757
    %1035 = vmatprep.subr.mxu0 %v760
    %1036 = vmatpush1.msra.mxu0 %v759
    %1037 = vmatprep.subr.mxu0 %v762
    %1038 = vmatpush1.msra.mxu0 %v761
    %1039 = vmatprep.subr.mxu0 %v764
    %1040 = vmatpush1.msra.mxu0 %v763
    %1041 = vmatprep.subr.mxu0 %v766
    %1042 = vmatpush1.msra.mxu0 %v765
    %1043 = vmatprep.subr.mxu0 %v768
    %1044 = vmatpush1.msra.mxu0 %v767
    %1045 = vmatprep.subr.mxu0 %v770
    %1046 = vmatpush1.msra.mxu0 %v769
    %1047 = vmatprep.subr.mxu0 %v772
    %1048 = vmatpush1.msra.mxu0 %v771
    %1049 = vmatprep.subr.mxu0 %v774
    %1050 = vmatpush1.msra.mxu0 %v773
    %1051 = vmatprep.subr.mxu0 %v776
    %1052 = vmatpush1.msra.mxu0 %v775
    %1053 = vmatprep.subr.mxu0 %v778
    %1054 = vmatpush1.msra.mxu0 %v777
    %1055 = vmatprep.subr.mxu0 %v780
    %1056 = vmatpush1.msra.mxu0 %v779
    %1057 = vmatprep.subr.mxu0 %v782
    %1058 = vmatpush1.msra.mxu0 %v781
    %1059 = vmatprep.subr.mxu0 %v784
    %1060 = vmatpush1.msra.mxu0 %v783
    %1061 = vmatprep.subr.mxu0 %v786
    %1062 = vmatpush1.msra.mxu0 %v785
    %1063 = vmatprep.subr.mxu0 %v788
    %1064 = vmatpush1.msra.mxu0 %v787
    %1065 = vmatprep.subr.mxu0 %v790
    %1066 = vmatpush1.msra.mxu0 %v789
    %1067 = vmatprep.subr.mxu0 %v792
    %1068 = vmatpush1.msra.mxu0 %v791
    %1069 = vmatprep.subr.mxu0 %v794
    %1070 = vmatpush1.msra.mxu0 %v793
    %1071 = vmatprep.subr.mxu0 %v796
    %1072 = vmatpush1.msra.mxu0 %v795
    %1073 = vmatprep.subr.mxu0 %v798
    %1074 = vmatpush1.msra.mxu0 %v797
    %1075 = vmatprep.subr.mxu0 %v800
    %1076 = vmatpush1.msra.mxu0 %v799
    %1077 = vmatprep.subr.mxu0 %v802
    %1078 = vmatpush1.msra.mxu0 %v801
    %1079 = vmatprep.subr.mxu0 %v804
    %1080 = vmatpush1.msra.mxu0 %v803
    %1081 = vmatprep.subr.mxu0 %v806
    %1082 = vmatpush1.msra.mxu0 %v805
    %1083 = vmatprep.mubr.f32.mxu0 %v674
    %1084 = vmatmul.mubr.f32.gmra.mrb[0].mxu0 %v673
    %v1085 = vpop.f32.mrb[0].mxu0
    %v1086 = vadd.f32 %v1015, %v1085
    %v1087 = vpop.f32.mrb[0].mxu0
    %v1088 = vadd.f32 %v1017, %v1087
    %1089 = vdwg.mxu0
    %1090 = vmatprep.subr.mxu0 %v808
    %1091 = vmatpush1.msra.mxu0 %v807
    %1092 = vmatprep.subr.mxu0 %v810
    %1093 = vmatpush1.msra.mxu0 %v809
    %1094 = vmatprep.subr.mxu0 %v812
    %1095 = vmatpush1.msra.mxu0 %v811
    %1096 = vmatprep.subr.mxu0 %v814
    %1097 = vmatpush1.msra.mxu0 %v813
    %1098 = vmatprep.subr.mxu0 %v816
    %1099 = vmatpush1.msra.mxu0 %v815
    %1100 = vmatprep.subr.mxu0 %v818
    %1101 = vmatpush1.msra.mxu0 %v817
    %1102 = vmatprep.subr.mxu0 %v820
    %1103 = vmatpush1.msra.mxu0 %v819
    %1104 = vmatprep.subr.mxu0 %v822
    %1105 = vmatpush1.msra.mxu0 %v821
    %1106 = vmatprep.subr.mxu0 %v824
    %1107 = vmatpush1.msra.mxu0 %v823
    %1108 = vmatprep.subr.mxu0 %v826
    %1109 = vmatpush1.msra.mxu0 %v825
    %1110 = vmatprep.subr.mxu0 %v828
    %1111 = vmatpush1.msra.mxu0 %v827
    %1112 = vmatprep.subr.mxu0 %v830
    %1113 = vmatpush1.msra.mxu0 %v829
    %1114 = vmatprep.subr.mxu0 %v832
    %1115 = vmatpush1.msra.mxu0 %v831
    %1116 = vmatprep.subr.mxu0 %v834
    %1117 = vmatpush1.msra.mxu0 %v833
    %1118 = vmatprep.subr.mxu0 %v836
    %1119 = vmatpush1.msra.mxu0 %v835
    %1120 = vmatprep.subr.mxu0 %v838
    %1121 = vmatpush1.msra.mxu0 %v837
    %1122 = vmatprep.subr.mxu0 %v840
    %1123 = vmatpush1.msra.mxu0 %v839
    %1124 = vmatprep.subr.mxu0 %v842
    %1125 = vmatpush1.msra.mxu0 %v841
    %1126 = vmatprep.subr.mxu0 %v844
    %1127 = vmatpush1.msra.mxu0 %v843
    %1128 = vmatprep.subr.mxu0 %v846
    %1129 = vmatpush1.msra.mxu0 %v845
    %1130 = vmatprep.subr.mxu0 %v848
    %1131 = vmatpush1.msra.mxu0 %v847
    %1132 = vmatprep.subr.mxu0 %v850
    %1133 = vmatpush1.msra.mxu0 %v849
    %1134 = vmatprep.subr.mxu0 %v852
    %1135 = vmatpush1.msra.mxu0 %v851
    %1136 = vmatprep.subr.mxu0 %v854
    %1137 = vmatpush1.msra.mxu0 %v853
    %1138 = vmatprep.subr.mxu0 %v856
    %1139 = vmatpush1.msra.mxu0 %v855
    %1140 = vmatprep.subr.mxu0 %v858
    %1141 = vmatpush1.msra.mxu0 %v857
    %1142 = vmatprep.subr.mxu0 %v860
    %1143 = vmatpush1.msra.mxu0 %v859
    %1144 = vmatprep.subr.mxu0 %v862
    %1145 = vmatpush1.msra.mxu0 %v861
    %1146 = vmatprep.subr.mxu0 %v864
    %1147 = vmatpush1.msra.mxu0 %v863
    %1148 = vmatprep.subr.mxu0 %v866
    %1149 = vmatpush1.msra.mxu0 %v865
    %1150 = vmatprep.subr.mxu0 %v868
    %1151 = vmatpush1.msra.mxu0 %v867
    %1152 = vmatprep.subr.mxu0 %v870
    %1153 = vmatpush1.msra.mxu0 %v869
    %1154 = vmatprep.mubr.f32.mxu0 %v676
    %1155 = vmatmul.mubr.f32.gmra.mrb[0].mxu0 %v675
    %v1156 = vpop.f32.mrb[0].mxu0
    %v1157 = vadd.f32 %v1086, %v1156
    %v1158 = vpop.f32.mrb[0].mxu0
    %v1159 = vadd.f32 %v1088, %v1158
    %1160 = vdwg.mxu0
    %1161 = vmatprep.subr.mxu0 %v872
    %1162 = vmatpush1.msra.mxu0 %v871
    %1163 = vmatprep.subr.mxu0 %v874
    %1164 = vmatpush1.msra.mxu0 %v873
    %1165 = vmatprep.subr.mxu0 %v876
    %1166 = vmatpush1.msra.mxu0 %v875
    %1167 = vmatprep.subr.mxu0 %v878
    %1168 = vmatpush1.msra.mxu0 %v877
    %1169 = vmatprep.subr.mxu0 %v880
    %1170 = vmatpush1.msra.mxu0 %v879
    %1171 = vmatprep.subr.mxu0 %v882
    %1172 = vmatpush1.msra.mxu0 %v881
    %1173 = vmatprep.subr.mxu0 %v884
    %1174 = vmatpush1.msra.mxu0 %v883
    %1175 = vmatprep.subr.mxu0 %v886
    %1176 = vmatpush1.msra.mxu0 %v885
    %1177 = vmatprep.subr.mxu0 %v888
    %1178 = vmatpush1.msra.mxu0 %v887
    %1179 = vmatprep.subr.mxu0 %v890
    %1180 = vmatpush1.msra.mxu0 %v889
    %1181 = vmatprep.subr.mxu0 %v892
    %1182 = vmatpush1.msra.mxu0 %v891
    %1183 = vmatprep.subr.mxu0 %v894
    %1184 = vmatpush1.msra.mxu0 %v893
    %1185 = vmatprep.subr.mxu0 %v896
    %1186 = vmatpush1.msra.mxu0 %v895
    %1187 = vmatprep.subr.mxu0 %v898
    %1188 = vmatpush1.msra.mxu0 %v897
    %1189 = vmatprep.subr.mxu0 %v900
    %1190 = vmatpush1.msra.mxu0 %v899
    %1191 = vmatprep.subr.mxu0 %v902
    %1192 = vmatpush1.msra.mxu0 %v901
    %1193 = vmatprep.subr.mxu0 %v904
    %1194 = vmatpush1.msra.mxu0 %v903
    %1195 = vmatprep.subr.mxu0 %v906
    %1196 = vmatpush1.msra.mxu0 %v905
    %1197 = vmatprep.subr.mxu0 %v908
    %1198 = vmatpush1.msra.mxu0 %v907
    %1199 = vmatprep.subr.mxu0 %v910
    %1200 = vmatpush1.msra.mxu0 %v909
    %1201 = vmatprep.subr.mxu0 %v912
    %1202 = vmatpush1.msra.mxu0 %v911
    %1203 = vmatprep.subr.mxu0 %v914
    %1204 = vmatpush1.msra.mxu0 %v913
    %1205 = vmatprep.subr.mxu0 %v916
    %1206 = vmatpush1.msra.mxu0 %v915
    %1207 = vmatprep.subr.mxu0 %v918
    %1208 = vmatpush1.msra.mxu0 %v917
    %1209 = vmatprep.subr.mxu0 %v920
    %1210 = vmatpush1.msra.mxu0 %v919
    %1211 = vmatprep.subr.mxu0 %v922
    %1212 = vmatpush1.msra.mxu0 %v921
    %1213 = vmatprep.subr.mxu0 %v924
    %1214 = vmatpush1.msra.mxu0 %v923
    %1215 = vmatprep.subr.mxu0 %v926
    %1216 = vmatpush1.msra.mxu0 %v925
    %1217 = vmatprep.subr.mxu0 %v928
    %1218 = vmatpush1.msra.mxu0 %v927
    %1219 = vmatprep.subr.mxu0 %v930
    %1220 = vmatpush1.msra.mxu0 %v929
    %1221 = vmatprep.subr.mxu0 %v932
    %1222 = vmatpush1.msra.mxu0 %v931
    %1223 = vmatprep.subr.mxu0 %v934
    %1224 = vmatpush1.msra.mxu0 %v933
    %1225 = vmatprep.mubr.f32.mxu0 %v678
    %1226 = vmatmul.mubr.f32.gmra.mrb[0].mxu0 %v677
    %v1227 = vpop.f32.mrb[0].mxu0
    %v1228 = vadd.f32 %v1157, %v1227
    %v1229 = vpop.f32.mrb[0].mxu0
    %v1230 = vadd.f32 %v1159, %v1229
    %1231 = vdwg.mxu0
    %v1232 = vmax.f32 %v1228, 0.0
    %v1233 = vmax.f32 %v1230, 0.0
    %v1234 = vld [vmem:[#allocation8] sm:$0xff]
    %v1235 = vld [vmem:[#allocation8 + $0x8] sm:$0xff]
    %v1236 = vld [vmem:[#allocation8 + $0x10] sm:$0xff]
    %v1237 = vld [vmem:[#allocation8 + $0x18] sm:$0xff]
    %v1238 = vld [vmem:[#allocation8 + $0x20] sm:$0xff]
    %v1239 = vld [vmem:[#allocation8 + $0x28] sm:$0xff]
    %v1240 = vld [vmem:[#allocation8 + $0x30] sm:$0xff]
    %v1241 = vld [vmem:[#allocation8 + $0x38] sm:$0xff]
    %v1242 = vld [vmem:[#allocation8 + $0x40] sm:$0xff]
    %v1243 = vld [vmem:[#allocation8 + $0x48] sm:$0xff]
    %v1244 = vld [vmem:[#allocation8 + $0x50] sm:$0xff]
    %v1245 = vld [vmem:[#allocation8 + $0x58] sm:$0xff]
    %v1246 = vld [vmem:[#allocation8 + $0x60] sm:$0xff]
    %v1247 = vld [vmem:[#allocation8 + $0x68] sm:$0xff]
    %v1248 = vld [vmem:[#allocation8 + $0x70] sm:$0xff]
    %v1249 = vld [vmem:[#allocation8 + $0x78] sm:$0xff]
    %v1250 = vld [vmem:[#allocation8 + $0x80] sm:$0xff]
    %v1251 = vld [vmem:[#allocation8 + $0x88] sm:$0xff]
    %v1252 = vld [vmem:[#allocation8 + $0x90] sm:$0xff]
    %v1253 = vld [vmem:[#allocation8 + $0x98] sm:$0xff]
    %v1254 = vld [vmem:[#allocation8 + $0xa0] sm:$0xff]
    %v1255 = vld [vmem:[#allocation8 + $0xa8] sm:$0xff]
    %v1256 = vld [vmem:[#allocation8 + $0xb0] sm:$0xff]
    %v1257 = vld [vmem:[#allocation8 + $0xb8] sm:$0xff]
    %v1258 = vld [vmem:[#allocation8 + $0xc0] sm:$0xff]
    %v1259 = vld [vmem:[#allocation8 + $0xc8] sm:$0xff]
    %v1260 = vld [vmem:[#allocation8 + $0xd0] sm:$0xff]
    %v1261 = vld [vmem:[#allocation8 + $0xd8] sm:$0xff]
    %v1262 = vld [vmem:[#allocation8 + $0xe0] sm:$0xff]
    %v1263 = vld [vmem:[#allocation8 + $0xe8] sm:$0xff]
    %v1264 = vld [vmem:[#allocation8 + $0xf0] sm:$0xff]
    %v1265 = vld [vmem:[#allocation8 + $0xf8] sm:$0xff]
    %v1266 = vld [vmem:[#allocation10 + $0x2] ss:$0 sm:$0xff]
    %1267 = vmatprep.subr.mxu0 0.0
    %1268 = vmatpush1.msra.mxu0 %v1234
    %1269 = vmatprep.subr.mxu0 0.0
    %1270 = vmatpush1.msra.mxu0 %v1235
    %1271 = vmatprep.subr.mxu0 0.0
    %1272 = vmatpush1.msra.mxu0 %v1236
    %1273 = vmatprep.subr.mxu0 0.0
    %1274 = vmatpush1.msra.mxu0 %v1237
    %1275 = vmatprep.subr.mxu0 0.0
    %1276 = vmatpush1.msra.mxu0 %v1238
    %1277 = vmatprep.subr.mxu0 0.0
    %1278 = vmatpush1.msra.mxu0 %v1239
    %1279 = vmatprep.subr.mxu0 0.0
    %1280 = vmatpush1.msra.mxu0 %v1240
    %1281 = vmatprep.subr.mxu0 0.0
    %1282 = vmatpush1.msra.mxu0 %v1241
    %1283 = vmatprep.subr.mxu0 0.0
    %1284 = vmatpush1.msra.mxu0 %v1242
    %1285 = vmatprep.subr.mxu0 0.0
    %1286 = vmatpush1.msra.mxu0 %v1243
    %1287 = vmatprep.subr.mxu0 0.0
    %1288 = vmatpush1.msra.mxu0 %v1244
    %1289 = vmatprep.subr.mxu0 0.0
    %1290 = vmatpush1.msra.mxu0 %v1245
    %1291 = vmatprep.subr.mxu0 0.0
    %1292 = vmatpush1.msra.mxu0 %v1246
    %1293 = vmatprep.subr.mxu0 0.0
    %1294 = vmatpush1.msra.mxu0 %v1247
    %1295 = vmatprep.subr.mxu0 0.0
    %1296 = vmatpush1.msra.mxu0 %v1248
    %1297 = vmatprep.subr.mxu0 0.0
    %1298 = vmatpush1.msra.mxu0 %v1249
    %1299 = vmatprep.subr.mxu0 0.0
    %1300 = vmatpush1.msra.mxu0 %v1250
    %1301 = vmatprep.subr.mxu0 0.0
    %1302 = vmatpush1.msra.mxu0 %v1251
    %1303 = vmatprep.subr.mxu0 0.0
    %1304 = vmatpush1.msra.mxu0 %v1252
    %1305 = vmatprep.subr.mxu0 0.0
    %1306 = vmatpush1.msra.mxu0 %v1253
    %1307 = vmatprep.subr.mxu0 0.0
    %1308 = vmatpush1.msra.mxu0 %v1254
    %1309 = vmatprep.subr.mxu0 0.0
    %1310 = vmatpush1.msra.mxu0 %v1255
    %1311 = vmatprep.subr.mxu0 0.0
    %1312 = vmatpush1.msra.mxu0 %v1256
    %1313 = vmatprep.subr.mxu0 0.0
    %1314 = vmatpush1.msra.mxu0 %v1257
    %1315 = vmatprep.subr.mxu0 0.0
    %1316 = vmatpush1.msra.mxu0 %v1258
    %1317 = vmatprep.subr.mxu0 0.0
    %1318 = vmatpush1.msra.mxu0 %v1259
    %1319 = vmatprep.subr.mxu0 0.0
    %1320 = vmatpush1.msra.mxu0 %v1260
    %1321 = vmatprep.subr.mxu0 0.0
    %1322 = vmatpush1.msra.mxu0 %v1261
    %1323 = vmatprep.subr.mxu0 0.0
    %1324 = vmatpush1.msra.mxu0 %v1262
    %1325 = vmatprep.subr.mxu0 0.0
    %1326 = vmatpush1.msra.mxu0 %v1263
    %1327 = vmatprep.subr.mxu0 0.0
    %1328 = vmatpush1.msra.mxu0 %v1264
    %1329 = vmatprep.subr.mxu0 0.0
    %1330 = vmatpush1.msra.mxu0 %v1265
    %1331 = vmatprep.mubr.f32.mxu0 %v1233
    %1332 = vmatmul.mubr.f32.gmra.mrb[0].mxu0 %v1232
    %v1333 = vpop.f32.mrb[0].mxu0
    %v1334 = vadd.f32 %v1266, %v1333
    %v1335 = vpop.f32.mrb[0].mxu0
    %1336 = vdwg.mxu0
    %v1337 = vmax.f32 %v1334, 0.0
    %v1338 = vld [vmem:[#allocation8 + $0x100] sm:$0xff]
    %v1339 = vld [vmem:[#allocation8 + $0x108] sm:$0xff]
    %v1340 = vld [vmem:[#allocation8 + $0x110] sm:$0xff]
    %v1341 = vld [vmem:[#allocation8 + $0x118] sm:$0xff]
    %v1342 = vld [vmem:[#allocation8 + $0x120] sm:$0xff]
    %v1343 = vld [vmem:[#allocation8 + $0x128] sm:$0xff]
    %v1344 = vld [vmem:[#allocation8 + $0x130] sm:$0xff]
    %v1345 = vld [vmem:[#allocation8 + $0x138] sm:$0xff]
    %v1346 = vld [vmem:[#allocation8 + $0x140] sm:$0xff]
    %v1347 = vld [vmem:[#allocation8 + $0x148] sm:$0xff]
    %v1348 = vld [vmem:[#allocation8 + $0x150] sm:$0xff]
    %v1349 = vld [vmem:[#allocation8 + $0x158] sm:$0xff]
    %v1350 = vld [vmem:[#allocation8 + $0x160] sm:$0xff]
    %v1351 = vld [vmem:[#allocation8 + $0x168] sm:$0xff]
    %v1352 = vld [vmem:[#allocation8 + $0x170] sm:$0xff]
    %v1353 = vld [vmem:[#allocation8 + $0x178] sm:$0xff]
    %v1354 = vld [vmem:[#allocation10 + $0x3] ss:$0 sm:$0xff]
    %1355 = vmatprep.subr.mxu0 0.0
    %1356 = vmatpush1.msra.mxu0 %v1338
    %1357 = vmatprep.subr.mxu0 0.0
    %1358 = vmatpush1.msra.mxu0 %v1339
    %1359 = vmatprep.subr.mxu0 0.0
    %1360 = vmatpush1.msra.mxu0 %v1340
    %1361 = vmatprep.subr.mxu0 0.0
    %1362 = vmatpush1.msra.mxu0 %v1341
    %1363 = vmatprep.subr.mxu0 0.0
    %1364 = vmatpush1.msra.mxu0 %v1342
    %1365 = vmatprep.subr.mxu0 0.0
    %1366 = vmatpush1.msra.mxu0 %v1343
    %1367 = vmatprep.subr.mxu0 0.0
    %1368 = vmatpush1.msra.mxu0 %v1344
    %1369 = vmatprep.subr.mxu0 0.0
    %1370 = vmatpush1.msra.mxu0 %v1345
    %1371 = vmatprep.subr.mxu0 0.0
    %1372 = vmatpush1.msra.mxu0 %v1346
    %1373 = vmatprep.subr.mxu0 0.0
    %1374 = vmatpush1.msra.mxu0 %v1347
    %1375 = vmatprep.subr.mxu0 0.0
    %1376 = vmatpush1.msra.mxu0 %v1348
    %1377 = vmatprep.subr.mxu0 0.0
    %1378 = vmatpush1.msra.mxu0 %v1349
    %1379 = vmatprep.subr.mxu0 0.0
    %1380 = vmatpush1.msra.mxu0 %v1350
    %1381 = vmatprep.subr.mxu0 0.0
    %1382 = vmatpush1.msra.mxu0 %v1351
    %1383 = vmatprep.subr.mxu0 0.0
    %1384 = vmatpush1.msra.mxu0 %v1352
    %1385 = vmatprep.subr.mxu0 0.0
    %1386 = vmatpush1.msra.mxu0 %v1353
    %1387 = vmatprep.subr.mxu0 0.0
    %1388 = vmatpush1.msra.mxu0 0.0
    %1389 = vmatprep.subr.mxu0 0.0
    %1390 = vmatpush1.msra.mxu0 0.0
    %1391 = vmatprep.subr.mxu0 0.0
    %1392 = vmatpush1.msra.mxu0 0.0
    %1393 = vmatprep.subr.mxu0 0.0
    %1394 = vmatpush1.msra.mxu0 0.0
    %1395 = vmatprep.subr.mxu0 0.0
    %1396 = vmatpush1.msra.mxu0 0.0
    %1397 = vmatprep.subr.mxu0 0.0
    %1398 = vmatpush1.msra.mxu0 0.0
    %1399 = vmatprep.subr.mxu0 0.0
    %1400 = vmatpush1.msra.mxu0 0.0
    %1401 = vmatprep.subr.mxu0 0.0
    %1402 = vmatpush1.msra.mxu0 0.0
    %1403 = vmatprep.subr.mxu0 0.0
    %1404 = vmatpush1.msra.mxu0 0.0
    %1405 = vmatprep.subr.mxu0 0.0
    %1406 = vmatpush1.msra.mxu0 0.0
    %1407 = vmatprep.subr.mxu0 0.0
    %1408 = vmatpush1.msra.mxu0 0.0
    %1409 = vmatprep.subr.mxu0 0.0
    %1410 = vmatpush1.msra.mxu0 0.0
    %1411 = vmatprep.subr.mxu0 0.0
    %1412 = vmatpush1.msra.mxu0 0.0
    %1413 = vmatprep.subr.mxu0 0.0
    %1414 = vmatpush1.msra.mxu0 0.0
    %1415 = vmatprep.subr.mxu0 0.0
    %1416 = vmatpush1.msra.mxu0 0.0
    %1417 = vmatprep.subr.mxu0 0.0
    %1418 = vmatpush1.msra.mxu0 0.0
    %1419 = vmatprep.mubr.f32.mxu0 0.0
    %1420 = vmatmul.mubr.f32.gmra.mrb[0].mxu0 %v1337
    %v1421 = vpop.f32.mrb[0].mxu0
    %v1422 = vadd.f32 %v1354, %v1421
    %v1423 = vpop.f32.mrb[0].mxu0
    %1424 = vdwg.mxu0
    %v1425 = vmax.f32 %v1422, 0.0
    %v1426 = vld [vmem:[#allocation8 + $0x180] sm:$0xff]
    %v1427 = vld [vmem:[#allocation8 + $0x188] sm:$0xff]
    %v1428 = vld [vmem:[#allocation8 + $0x190] sm:$0xff]
    %v1429 = vld [vmem:[#allocation8 + $0x198] sm:$0xff]
    %v1430 = vld [vmem:[#allocation8 + $0x1a0] sm:$0xff]
    %v1431 = vld [vmem:[#allocation8 + $0x1a8] sm:$0xff]
    %v1432 = vld [vmem:[#allocation8 + $0x1b0] sm:$0xff]
    %v1433 = vld [vmem:[#allocation8 + $0x1b8] sm:$0xff]
    %v1434 = vld [vmem:[#allocation8 + $0x1c0] sm:$0xff]
    %v1435 = vld [vmem:[#allocation8 + $0x1c8] sm:$0xff]
    %v1436 = vld [vmem:[#allocation8 + $0x1d0] sm:$0xff]
    %v1437 = vld [vmem:[#allocation8 + $0x1d8] sm:$0xff]
    %v1438 = vld [vmem:[#allocation8 + $0x1e0] sm:$0xff]
    %v1439 = vld [vmem:[#allocation8 + $0x1e8] sm:$0xff]
    %v1440 = vld [vmem:[#allocation8 + $0x1f0] sm:$0xff]
    %v1441 = vld [vmem:[#allocation8 + $0x1f8] sm:$0xff]
    %v1442 = vld [vmem:[#allocation10 + $0x4] ss:$0 sm:$0xff]
    %1443 = vmatprep.subr.mxu0 0.0
    %1444 = vmatpush1.msra.mxu0 %v1426
    %1445 = vmatprep.subr.mxu0 0.0
    %1446 = vmatpush1.msra.mxu0 %v1427
    %1447 = vmatprep.subr.mxu0 0.0
    %1448 = vmatpush1.msra.mxu0 %v1428
    %1449 = vmatprep.subr.mxu0 0.0
    %1450 = vmatpush1.msra.mxu0 %v1429
    %1451 = vmatprep.subr.mxu0 0.0
    %1452 = vmatpush1.msra.mxu0 %v1430
    %1453 = vmatprep.subr.mxu0 0.0
    %1454 = vmatpush1.msra.mxu0 %v1431
    %1455 = vmatprep.subr.mxu0 0.0
    %1456 = vmatpush1.msra.mxu0 %v1432
    %1457 = vmatprep.subr.mxu0 0.0
    %1458 = vmatpush1.msra.mxu0 %v1433
    %1459 = vmatprep.subr.mxu0 0.0
    %1460 = vmatpush1.msra.mxu0 %v1434
    %1461 = vmatprep.subr.mxu0 0.0
    %1462 = vmatpush1.msra.mxu0 %v1435
    %1463 = vmatprep.subr.mxu0 0.0
    %1464 = vmatpush1.msra.mxu0 %v1436
    %1465 = vmatprep.subr.mxu0 0.0
    %1466 = vmatpush1.msra.mxu0 %v1437
    %1467 = vmatprep.subr.mxu0 0.0
    %1468 = vmatpush1.msra.mxu0 %v1438
    %1469 = vmatprep.subr.mxu0 0.0
    %1470 = vmatpush1.msra.mxu0 %v1439
    %1471 = vmatprep.subr.mxu0 0.0
    %1472 = vmatpush1.msra.mxu0 %v1440
    %1473 = vmatprep.subr.mxu0 0.0
    %1474 = vmatpush1.msra.mxu0 %v1441
    %1475 = vmatprep.subr.mxu0 0.0
    %1476 = vmatpush1.msra.mxu0 0.0
    %1477 = vmatprep.subr.mxu0 0.0
    %1478 = vmatpush1.msra.mxu0 0.0
    %1479 = vmatprep.subr.mxu0 0.0
    %1480 = vmatpush1.msra.mxu0 0.0
    %1481 = vmatprep.subr.mxu0 0.0
    %1482 = vmatpush1.msra.mxu0 0.0
    %1483 = vmatprep.subr.mxu0 0.0
    %1484 = vmatpush1.msra.mxu0 0.0
    %1485 = vmatprep.subr.mxu0 0.0
    %1486 = vmatpush1.msra.mxu0 0.0
    %1487 = vmatprep.subr.mxu0 0.0
    %1488 = vmatpush1.msra.mxu0 0.0
    %1489 = vmatprep.subr.mxu0 0.0
    %1490 = vmatpush1.msra.mxu0 0.0
    %1491 = vmatprep.subr.mxu0 0.0
    %1492 = vmatpush1.msra.mxu0 0.0
    %1493 = vmatprep.subr.mxu0 0.0
    %1494 = vmatpush1.msra.mxu0 0.0
    %1495 = vmatprep.subr.mxu0 0.0
    %1496 = vmatpush1.msra.mxu0 0.0
    %1497 = vmatprep.subr.mxu0 0.0
    %1498 = vmatpush1.msra.mxu0 0.0
    %1499 = vmatprep.subr.mxu0 0.0
    %1500 = vmatpush1.msra.mxu0 0.0
    %1501 = vmatprep.subr.mxu0 0.0
    %1502 = vmatpush1.msra.mxu0 0.0
    %1503 = vmatprep.subr.mxu0 0.0
    %1504 = vmatpush1.msra.mxu0 0.0
    %1505 = vmatprep.subr.mxu0 0.0
    %1506 = vmatpush1.msra.mxu0 0.0
    %1507 = vmatprep.mubr.f32.mxu0 0.0
    %1508 = vmatmul.mubr.f32.gmra.mrb[0].mxu0 %v1425
    %v1509 = vpop.f32.mrb[0].mxu0
    %v1510 = vadd.f32 %v1442, %v1509
    %v1511 = vpop.f32.mrb[0].mxu0
    %1512 = vdwg.mxu0
    %1513 = vst [vmem:[#allocation11] sm:$0xff] %v1510
    // Predicated region
    $region42: #{tpu_custom_call.1} parent=1 // pred_check
      _
    $region43: #{tpu_custom_call.1} parent=1 // pred_check_branch
      %1515 = sbr.rel (0) target = $region45
    $region44: #{tpu_custom_call.1} parent=1 // pred_region
      %s1517 = ssub.s32 128, 128
      %1518 = vsyncadd [#allocation4], %s1517
      %s1520 = sshll.u32 [#allocation11], 4
      %s1521 = int_to_ptr.vmem [resolvable:$true] %s1520
      %1523 = dma.vmem_to_hbm [thread:$0]  %s1521, 128, %s5, [#allocation4]
    $region45: #{tpu_custom_call.1} parent=1 // pred_fallthru
      _
    // Predicated region
    $region46: #{tpu_custom_call.1} parent=1 // pred_check
      _
    $region47: #{tpu_custom_call.1} parent=1 // pred_check_branch
      %1525 = sbr.rel (0) target = $region49
    $region48: #{tpu_custom_call.1} parent=1 // pred_region
      %1526 = dma.done [#allocation4], 128
    $region49: #{tpu_custom_call.1} parent=1 // pred_fallthru
      _
    %1527 = vsyncpa [#allocation3], 1
    %1528 = vsyncpa [#allocation6], 1
    %1529 = vsyncpa [#allocation9], 1
    %1530 = vsyncpa [#allocation4], 1

</llo_original>
